<compile_context>
chip_gen: v6e
topology: v6e:2x2x1
jax: 0.10.0
libtpu: 0.0.40
codegen_flags: <defaults>
</compile_context>

<pallas_src>
import math
import functools

import numpy as np
import jax
import jax.numpy as jnp
from jax.experimental import pallas as pl
from jax.experimental.pallas import tpu as pltpu


OUT_W = 8  # lane-padded width of the single consolidated output slab


# ---------------------------------------------------------------------------
# Pallas kernel: all `flow_num` coupling steps + Gaussian base log-density.
# ---------------------------------------------------------------------------
def _realnvp_kernel(x_ref, w1_ref, b1_ref, w2_ref, b2_ref, w3_ref, b3_ref,
                    w4_ref, b4_ref, out_ref, *, flow_num):
    x = x_ref[...]                               # (TB, 2) f32
    a = x[:, 0:1]                                # z0_old
    b = x[:, 1:2]                                # z1_old
    logdet = jnp.zeros_like(a)                   # running sum of log-det-grad

    for i in range(flow_num):                    # sequential by construction; unrolled
        # coupling MLP on z0_old (evaluated ONCE per flow, unlike the PyTorch code)
        h1 = jnp.maximum(a * w1_ref[i] + b1_ref[i], 0.0)                     # (TB,10)
        h2 = jnp.maximum(
            jnp.dot(h1, w2_ref[i], preferred_element_type=jnp.float32) + b2_ref[i], 0.0)
        h3 = jnp.tanh(
            jnp.dot(h2, w3_ref[i], preferred_element_type=jnp.float32) + b3_ref[i])
        st = jnp.dot(h3, w4_ref[i], preferred_element_type=jnp.float32) + b4_ref[i]  # (TB,2)

        s = st[:, 0:1]                           # log-scale
        t = st[:, 1:2]                           # shift
        z1_new = jnp.exp(s) * b + t
        logdet = logdet + s                      # log(exp(s)) == s  (no log needed)
        a, b = z1_new, a                         # swap, matching the PyTorch loop

    z0_new = b                                   # value from the last iteration
    z1_new = a
    # log N(z0) + log N(z1), computed in log-space (no exp -> log round trip)
    log_pz = -math.log(2.0 * math.pi) - 0.5 * (z0_new * z0_new + z1_new * z1_new)
    log_prob = log_pz + logdet                   # (TB, 1)

    tb = x.shape[0]
    pad = jnp.zeros((tb, out_ref.shape[1] - 3), jnp.float32)
    # single lane-packed store: [log_prob | z0_new | z1_new | zeros]
    out_ref[...] = jnp.concatenate([log_prob, z0_new, z1_new, pad], axis=1)


# ---------------------------------------------------------------------------
# Wrapper: batch-tiled pallas_call.
# ---------------------------------------------------------------------------
def realnvp_forward(x, params, flow_num):
    w1, b1, w2, b2, w3, b3, w4, b4 = params
    x = x.astype(jnp.float32)
    B = x.shape[0]

    TB = 8 if B <= 128 else 128                  # batch tile (multiple of 8)
    Bp = ((B + TB - 1) // TB) * TB
    xp = x if Bp == B else jnp.pad(x, ((0, Bp - B), (0, 0)))

    weight_args = (w1, b1, w2, b2, w3, b3, w4, b4)
    in_specs = [pl.BlockSpec((TB, 2), lambda i: (i, 0))]
    for w in weight_args:                        # weights: full-array blocks, VMEM-resident
        in_specs.append(pl.BlockSpec(w.shape, lambda i, nd=w.ndim: (0,) * nd))
    out_spec = pl.BlockSpec((TB, OUT_W), lambda i: (i, 0))

    out = pl.pallas_call(
        functools.partial(_realnvp_kernel, flow_num=flow_num),
        out_shape=jax.ShapeDtypeStruct((Bp, OUT_W), jnp.float32),
        grid=(Bp // TB,),
        in_specs=in_specs,
        out_specs=out_spec,
        compiler_params=pltpu.CompilerParams(dimension_semantics=("parallel",)),
    )(xp, *weight_args)

    log_prob = out[:B, 0:1]                      # (B, 1), matches PyTorch shape
    latents = out[:B, 1:3]                       # (B, 2) == cat((z0_new, z1_new), dim=1)
    return log_prob, latents


# ---------------------------------------------------------------------------
# Deterministic parameter construction (mirrors nn.Linear default init; weights
# are produced directly in (in, out) layout, stacked across flows).
# ---------------------------------------------------------------------------
def init_realnvp_params(key, flow_num):
    layer_dims = [(1, 10), (10, 10), (10, 20), (20, 2)]
    keys = jax.random.split(key, 2 * len(layer_dims))
    ws, bs = [], []
    for li, (fan_in, fan_out) in enumerate(layer_dims):
        bound = 1.0 / math.sqrt(fan_in)
        W = jax.random.uniform(keys[2 * li], (flow_num, fan_in, fan_out),
                               jnp.float32, -bound, bound)
        b = jax.random.uniform(keys[2 * li + 1], (flow_num, 1, fan_out),
                               jnp.float32, -bound, bound)
        ws.append(W)
        bs.append(b)
    return ws[0], bs[0], ws[1], bs[1], ws[2], bs[2], ws[3], bs[3]


# ---------------------------------------------------------------------------
# Pure-JAX reference mirroring the PyTorch forward literally (exp -> log included).
# ---------------------------------------------------------------------------
def realnvp_reference(x, params, flow_num):
    w1, b1, w2, b2, w3, b3, w4, b4 = params
    x = x.astype(jnp.float32)
    a = x[:, 0:1]
    b = x[:, 1:2]
    logdet = jnp.zeros_like(a)
    for i in range(flow_num):
        h1 = jax.nn.relu(a @ w1[i] + b1[i])
        h2 = jax.nn.relu(h1 @ w2[i] + b2[i])
        h3 = jnp.tanh(h2 @ w3[i] + b3[i])
        st = h3 @ w4[i] + b4[i]
        scale = jnp.exp(st[:, 0:1])
        shift = st[:, 1:2]
        z1_new = scale * b + shift
        logdet = logdet + jnp.log(scale)
        a, b = z1_new, a
    z0_new, z1_new = b, a
    c = 1.0 / math.sqrt(2.0 * math.pi)
    pz = (c * jnp.exp(-0.5 * z0_new ** 2)) * (c * jnp.exp(-0.5 * z1_new ** 2))
    log_pz = jnp.log(pz)
    return log_pz + logdet, jnp.concatenate([z0_new, z1_new], axis=1)


if __name__ == "__main__":
    flow_num = 4
    batch = 8

    key = jax.random.PRNGKey(0)
    k_x, k_p = jax.random.split(key)
    x = jax.random.normal(k_x, (batch, 2), dtype=jnp.float32)
    params = init_realnvp_params(k_p, flow_num)

    log_prob, latents = realnvp_forward(x, params, flow_num)
    jax.block_until_ready((log_prob, latents))

    lp_ref, lat_ref = realnvp_reference(x, params, flow_num)
    np.testing.assert_allclose(np.asarray(log_prob), np.asarray(lp_ref), rtol=1e-4, atol=1e-4)
    np.testing.assert_allclose(np.asarray(latents), np.asarray(lat_ref), rtol=1e-4, atol=1e-4)

    print("KERNEL_OK")
</pallas_src>

<mosaic_0001>
module attributes {stable_mosaic.version = 11 : i64} {
  func.func @_realnvp_kernel(%arg0: i32, %arg1: memref<8x2xf32, #tpu.memory_space<vmem>>, %arg2: memref<4x1x10xf32, #tpu.memory_space<vmem>>, %arg3: memref<4x1x10xf32, #tpu.memory_space<vmem>>, %arg4: memref<4x10x10xf32, #tpu.memory_space<vmem>>, %arg5: memref<4x1x10xf32, #tpu.memory_space<vmem>>, %arg6: memref<4x10x20xf32, #tpu.memory_space<vmem>>, %arg7: memref<4x1x20xf32, #tpu.memory_space<vmem>>, %arg8: memref<4x20x2xf32, #tpu.memory_space<vmem>>, %arg9: memref<4x1x2xf32, #tpu.memory_space<vmem>>, %arg10: memref<8x8xf32, #tpu.memory_space<vmem>>) attributes {dimension_semantics = [#tpu.dimension_semantics<parallel>], iteration_bounds = array<i64: 1>, scalar_prefetch = 0 : i64, scratch_operands = 0 : i64, tpu.core_type = #tpu.core_type<tc>, window_params = [{transform_indices = @transform_0, window_bounds = array<i64: 8, 2>}, {pipeline_mode = #tpu.pipeline_mode<synchronous>, transform_indices = @transform_1, window_bounds = array<i64: 4, 1, 10>}, {pipeline_mode = #tpu.pipeline_mode<synchronous>, transform_indices = @transform_2, window_bounds = array<i64: 4, 1, 10>}, {pipeline_mode = #tpu.pipeline_mode<synchronous>, transform_indices = @transform_3, window_bounds = array<i64: 4, 10, 10>}, {pipeline_mode = #tpu.pipeline_mode<synchronous>, transform_indices = @transform_4, window_bounds = array<i64: 4, 1, 10>}, {pipeline_mode = #tpu.pipeline_mode<synchronous>, transform_indices = @transform_5, window_bounds = array<i64: 4, 10, 20>}, {pipeline_mode = #tpu.pipeline_mode<synchronous>, transform_indices = @transform_6, window_bounds = array<i64: 4, 1, 20>}, {pipeline_mode = #tpu.pipeline_mode<synchronous>, transform_indices = @transform_7, window_bounds = array<i64: 4, 20, 2>}, {pipeline_mode = #tpu.pipeline_mode<synchronous>, transform_indices = @transform_8, window_bounds = array<i64: 4, 1, 2>}, {transform_indices = @transform_9, window_bounds = array<i64: 8, 8>}]} {
    %c0 = arith.constant 0 : index
    %c0_0 = arith.constant 0 : index
    %0 = vector.load %arg1[%c0, %c0_0] : memref<8x2xf32, #tpu.memory_space<vmem>>, vector<8x2xf32>
    %1 = vector.extract_strided_slice %0 {offsets = [0, 0], sizes = [8, 1], strides = [1, 1]} : vector<8x2xf32> to vector<8x1xf32>
    %2 = vector.extract_strided_slice %0 {offsets = [0, 1], sizes = [8, 1], strides = [1, 1]} : vector<8x2xf32> to vector<8x1xf32>
    %cst = arith.constant 0.000000e+00 : f32
    %3 = vector.broadcast %cst : f32 to vector<8x1xf32>
    %c0_1 = arith.constant 0 : index
    %c0_2 = arith.constant 0 : index
    %c0_3 = arith.constant 0 : index
    %4 = vector.load %arg2[%c0_1, %c0_2, %c0_3] : memref<4x1x10xf32, #tpu.memory_space<vmem>>, vector<1x1x10xf32>
    %5 = vector.shape_cast %4 : vector<1x1x10xf32> to vector<1x10xf32>
    %6 = vector.broadcast %1 : vector<8x1xf32> to vector<8x10xf32>
    %7 = vector.broadcast %5 : vector<1x10xf32> to vector<8x10xf32>
    %8 = arith.mulf %6, %7 : vector<8x10xf32>
    %c0_4 = arith.constant 0 : index
    %c0_5 = arith.constant 0 : index
    %c0_6 = arith.constant 0 : index
    %9 = vector.load %arg3[%c0_4, %c0_5, %c0_6] : memref<4x1x10xf32, #tpu.memory_space<vmem>>, vector<1x1x10xf32>
    %10 = vector.shape_cast %9 : vector<1x1x10xf32> to vector<1x10xf32>
    %11 = vector.broadcast %10 : vector<1x10xf32> to vector<8x10xf32>
    %12 = arith.addf %8, %11 : vector<8x10xf32>
    %cst_7 = arith.constant 0.000000e+00 : f32
    %13 = vector.broadcast %cst_7 : f32 to vector<8x10xf32>
    %14 = arith.maximumf %12, %13 : vector<8x10xf32>
    %c0_8 = arith.constant 0 : index
    %c0_9 = arith.constant 0 : index
    %c0_10 = arith.constant 0 : index
    %15 = vector.load %arg4[%c0_8, %c0_9, %c0_10] : memref<4x10x10xf32, #tpu.memory_space<vmem>>, vector<1x10x10xf32>
    %16 = vector.shape_cast %15 : vector<1x10x10xf32> to vector<10x10xf32>
    %cst_11 = arith.constant dense<0.000000e+00> : vector<8x10xf32>
    %17 = tpu.matmul %14, %16, %cst_11 {dimension_numbers = #tpu.dot_dimension_numbers<[1], [0], [0], [1], [0, 0, 1, 1], [], []>} : vector<8x10xf32>, vector<10x10xf32>, vector<8x10xf32> -> vector<8x10xf32>
    %c0_12 = arith.constant 0 : index
    %c0_13 = arith.constant 0 : index
    %c0_14 = arith.constant 0 : index
    %18 = vector.load %arg5[%c0_12, %c0_13, %c0_14] : memref<4x1x10xf32, #tpu.memory_space<vmem>>, vector<1x1x10xf32>
    %19 = vector.shape_cast %18 : vector<1x1x10xf32> to vector<1x10xf32>
    %20 = vector.broadcast %19 : vector<1x10xf32> to vector<8x10xf32>
    %21 = arith.addf %17, %20 : vector<8x10xf32>
    %cst_15 = arith.constant 0.000000e+00 : f32
    %22 = vector.broadcast %cst_15 : f32 to vector<8x10xf32>
    %23 = arith.maximumf %21, %22 : vector<8x10xf32>
    %c0_16 = arith.constant 0 : index
    %c0_17 = arith.constant 0 : index
    %c0_18 = arith.constant 0 : index
    %24 = vector.load %arg6[%c0_16, %c0_17, %c0_18] : memref<4x10x20xf32, #tpu.memory_space<vmem>>, vector<1x10x20xf32>
    %25 = vector.shape_cast %24 : vector<1x10x20xf32> to vector<10x20xf32>
    %cst_19 = arith.constant dense<0.000000e+00> : vector<8x20xf32>
    %26 = tpu.matmul %23, %25, %cst_19 {dimension_numbers = #tpu.dot_dimension_numbers<[1], [0], [0], [1], [0, 0, 1, 1], [], []>} : vector<8x10xf32>, vector<10x20xf32>, vector<8x20xf32> -> vector<8x20xf32>
    %c0_20 = arith.constant 0 : index
    %c0_21 = arith.constant 0 : index
    %c0_22 = arith.constant 0 : index
    %27 = vector.load %arg7[%c0_20, %c0_21, %c0_22] : memref<4x1x20xf32, #tpu.memory_space<vmem>>, vector<1x1x20xf32>
    %28 = vector.shape_cast %27 : vector<1x1x20xf32> to vector<1x20xf32>
    %29 = vector.broadcast %28 : vector<1x20xf32> to vector<8x20xf32>
    %30 = arith.addf %26, %29 : vector<8x20xf32>
    %31 = math.tanh %30 : vector<8x20xf32>
    %c0_23 = arith.constant 0 : index
    %c0_24 = arith.constant 0 : index
    %c0_25 = arith.constant 0 : index
    %32 = vector.load %arg8[%c0_23, %c0_24, %c0_25] : memref<4x20x2xf32, #tpu.memory_space<vmem>>, vector<1x20x2xf32>
    %33 = vector.shape_cast %32 : vector<1x20x2xf32> to vector<20x2xf32>
    %cst_26 = arith.constant dense<0.000000e+00> : vector<8x2xf32>
    %34 = tpu.matmul %31, %33, %cst_26 {dimension_numbers = #tpu.dot_dimension_numbers<[1], [0], [0], [1], [0, 0, 1, 1], [], []>} : vector<8x20xf32>, vector<20x2xf32>, vector<8x2xf32> -> vector<8x2xf32>
    %c0_27 = arith.constant 0 : index
    %c0_28 = arith.constant 0 : index
    %c0_29 = arith.constant 0 : index
    %35 = vector.load %arg9[%c0_27, %c0_28, %c0_29] : memref<4x1x2xf32, #tpu.memory_space<vmem>>, vector<1x1x2xf32>
    %36 = vector.shape_cast %35 : vector<1x1x2xf32> to vector<1x2xf32>
    %37 = vector.broadcast %36 : vector<1x2xf32> to vector<8x2xf32>
    %38 = arith.addf %34, %37 : vector<8x2xf32>
    %39 = vector.extract_strided_slice %38 {offsets = [0, 0], sizes = [8, 1], strides = [1, 1]} : vector<8x2xf32> to vector<8x1xf32>
    %40 = vector.extract_strided_slice %38 {offsets = [0, 1], sizes = [8, 1], strides = [1, 1]} : vector<8x2xf32> to vector<8x1xf32>
    %41 = math.exp %39 : vector<8x1xf32>
    %42 = arith.mulf %41, %2 : vector<8x1xf32>
    %43 = arith.addf %42, %40 : vector<8x1xf32>
    %44 = arith.addf %3, %39 : vector<8x1xf32>
    %c1 = arith.constant 1 : index
    %c0_30 = arith.constant 0 : index
    %c0_31 = arith.constant 0 : index
    %45 = vector.load %arg2[%c1, %c0_30, %c0_31] : memref<4x1x10xf32, #tpu.memory_space<vmem>>, vector<1x1x10xf32>
    %46 = vector.shape_cast %45 : vector<1x1x10xf32> to vector<1x10xf32>
    %47 = vector.broadcast %43 : vector<8x1xf32> to vector<8x10xf32>
    %48 = vector.broadcast %46 : vector<1x10xf32> to vector<8x10xf32>
    %49 = arith.mulf %47, %48 : vector<8x10xf32>
    %c1_32 = arith.constant 1 : index
    %c0_33 = arith.constant 0 : index
    %c0_34 = arith.constant 0 : index
    %50 = vector.load %arg3[%c1_32, %c0_33, %c0_34] : memref<4x1x10xf32, #tpu.memory_space<vmem>>, vector<1x1x10xf32>
    %51 = vector.shape_cast %50 : vector<1x1x10xf32> to vector<1x10xf32>
    %52 = vector.broadcast %51 : vector<1x10xf32> to vector<8x10xf32>
    %53 = arith.addf %49, %52 : vector<8x10xf32>
    %cst_35 = arith.constant 0.000000e+00 : f32
    %54 = vector.broadcast %cst_35 : f32 to vector<8x10xf32>
    %55 = arith.maximumf %53, %54 : vector<8x10xf32>
    %c1_36 = arith.constant 1 : index
    %c0_37 = arith.constant 0 : index
    %c0_38 = arith.constant 0 : index
    %56 = vector.load %arg4[%c1_36, %c0_37, %c0_38] : memref<4x10x10xf32, #tpu.memory_space<vmem>>, vector<1x10x10xf32>
    %57 = vector.shape_cast %56 : vector<1x10x10xf32> to vector<10x10xf32>
    %cst_39 = arith.constant dense<0.000000e+00> : vector<8x10xf32>
    %58 = tpu.matmul %55, %57, %cst_39 {dimension_numbers = #tpu.dot_dimension_numbers<[1], [0], [0], [1], [0, 0, 1, 1], [], []>} : vector<8x10xf32>, vector<10x10xf32>, vector<8x10xf32> -> vector<8x10xf32>
    %c1_40 = arith.constant 1 : index
    %c0_41 = arith.constant 0 : index
    %c0_42 = arith.constant 0 : index
    %59 = vector.load %arg5[%c1_40, %c0_41, %c0_42] : memref<4x1x10xf32, #tpu.memory_space<vmem>>, vector<1x1x10xf32>
    %60 = vector.shape_cast %59 : vector<1x1x10xf32> to vector<1x10xf32>
    %61 = vector.broadcast %60 : vector<1x10xf32> to vector<8x10xf32>
    %62 = arith.addf %58, %61 : vector<8x10xf32>
    %cst_43 = arith.constant 0.000000e+00 : f32
    %63 = vector.broadcast %cst_43 : f32 to vector<8x10xf32>
    %64 = arith.maximumf %62, %63 : vector<8x10xf32>
    %c1_44 = arith.constant 1 : index
    %c0_45 = arith.constant 0 : index
    %c0_46 = arith.constant 0 : index
    %65 = vector.load %arg6[%c1_44, %c0_45, %c0_46] : memref<4x10x20xf32, #tpu.memory_space<vmem>>, vector<1x10x20xf32>
    %66 = vector.shape_cast %65 : vector<1x10x20xf32> to vector<10x20xf32>
    %cst_47 = arith.constant dense<0.000000e+00> : vector<8x20xf32>
    %67 = tpu.matmul %64, %66, %cst_47 {dimension_numbers = #tpu.dot_dimension_numbers<[1], [0], [0], [1], [0, 0, 1, 1], [], []>} : vector<8x10xf32>, vector<10x20xf32>, vector<8x20xf32> -> vector<8x20xf32>
    %c1_48 = arith.constant 1 : index
    %c0_49 = arith.constant 0 : index
    %c0_50 = arith.constant 0 : index
    %68 = vector.load %arg7[%c1_48, %c0_49, %c0_50] : memref<4x1x20xf32, #tpu.memory_space<vmem>>, vector<1x1x20xf32>
    %69 = vector.shape_cast %68 : vector<1x1x20xf32> to vector<1x20xf32>
    %70 = vector.broadcast %69 : vector<1x20xf32> to vector<8x20xf32>
    %71 = arith.addf %67, %70 : vector<8x20xf32>
    %72 = math.tanh %71 : vector<8x20xf32>
    %c1_51 = arith.constant 1 : index
    %c0_52 = arith.constant 0 : index
    %c0_53 = arith.constant 0 : index
    %73 = vector.load %arg8[%c1_51, %c0_52, %c0_53] : memref<4x20x2xf32, #tpu.memory_space<vmem>>, vector<1x20x2xf32>
    %74 = vector.shape_cast %73 : vector<1x20x2xf32> to vector<20x2xf32>
    %cst_54 = arith.constant dense<0.000000e+00> : vector<8x2xf32>
    %75 = tpu.matmul %72, %74, %cst_54 {dimension_numbers = #tpu.dot_dimension_numbers<[1], [0], [0], [1], [0, 0, 1, 1], [], []>} : vector<8x20xf32>, vector<20x2xf32>, vector<8x2xf32> -> vector<8x2xf32>
    %c1_55 = arith.constant 1 : index
    %c0_56 = arith.constant 0 : index
    %c0_57 = arith.constant 0 : index
    %76 = vector.load %arg9[%c1_55, %c0_56, %c0_57] : memref<4x1x2xf32, #tpu.memory_space<vmem>>, vector<1x1x2xf32>
    %77 = vector.shape_cast %76 : vector<1x1x2xf32> to vector<1x2xf32>
    %78 = vector.broadcast %77 : vector<1x2xf32> to vector<8x2xf32>
    %79 = arith.addf %75, %78 : vector<8x2xf32>
    %80 = vector.extract_strided_slice %79 {offsets = [0, 0], sizes = [8, 1], strides = [1, 1]} : vector<8x2xf32> to vector<8x1xf32>
    %81 = vector.extract_strided_slice %79 {offsets = [0, 1], sizes = [8, 1], strides = [1, 1]} : vector<8x2xf32> to vector<8x1xf32>
    %82 = math.exp %80 : vector<8x1xf32>
    %83 = arith.mulf %82, %1 : vector<8x1xf32>
    %84 = arith.addf %83, %81 : vector<8x1xf32>
    %85 = arith.addf %44, %80 : vector<8x1xf32>
    %c2 = arith.constant 2 : index
    %c0_58 = arith.constant 0 : index
    %c0_59 = arith.constant 0 : index
    %86 = vector.load %arg2[%c2, %c0_58, %c0_59] : memref<4x1x10xf32, #tpu.memory_space<vmem>>, vector<1x1x10xf32>
    %87 = vector.shape_cast %86 : vector<1x1x10xf32> to vector<1x10xf32>
    %88 = vector.broadcast %84 : vector<8x1xf32> to vector<8x10xf32>
    %89 = vector.broadcast %87 : vector<1x10xf32> to vector<8x10xf32>
    %90 = arith.mulf %88, %89 : vector<8x10xf32>
    %c2_60 = arith.constant 2 : index
    %c0_61 = arith.constant 0 : index
    %c0_62 = arith.constant 0 : index
    %91 = vector.load %arg3[%c2_60, %c0_61, %c0_62] : memref<4x1x10xf32, #tpu.memory_space<vmem>>, vector<1x1x10xf32>
    %92 = vector.shape_cast %91 : vector<1x1x10xf32> to vector<1x10xf32>
    %93 = vector.broadcast %92 : vector<1x10xf32> to vector<8x10xf32>
    %94 = arith.addf %90, %93 : vector<8x10xf32>
    %cst_63 = arith.constant 0.000000e+00 : f32
    %95 = vector.broadcast %cst_63 : f32 to vector<8x10xf32>
    %96 = arith.maximumf %94, %95 : vector<8x10xf32>
    %c2_64 = arith.constant 2 : index
    %c0_65 = arith.constant 0 : index
    %c0_66 = arith.constant 0 : index
    %97 = vector.load %arg4[%c2_64, %c0_65, %c0_66] : memref<4x10x10xf32, #tpu.memory_space<vmem>>, vector<1x10x10xf32>
    %98 = vector.shape_cast %97 : vector<1x10x10xf32> to vector<10x10xf32>
    %cst_67 = arith.constant dense<0.000000e+00> : vector<8x10xf32>
    %99 = tpu.matmul %96, %98, %cst_67 {dimension_numbers = #tpu.dot_dimension_numbers<[1], [0], [0], [1], [0, 0, 1, 1], [], []>} : vector<8x10xf32>, vector<10x10xf32>, vector<8x10xf32> -> vector<8x10xf32>
    %c2_68 = arith.constant 2 : index
    %c0_69 = arith.constant 0 : index
    %c0_70 = arith.constant 0 : index
    %100 = vector.load %arg5[%c2_68, %c0_69, %c0_70] : memref<4x1x10xf32, #tpu.memory_space<vmem>>, vector<1x1x10xf32>
    %101 = vector.shape_cast %100 : vector<1x1x10xf32> to vector<1x10xf32>
    %102 = vector.broadcast %101 : vector<1x10xf32> to vector<8x10xf32>
    %103 = arith.addf %99, %102 : vector<8x10xf32>
    %cst_71 = arith.constant 0.000000e+00 : f32
    %104 = vector.broadcast %cst_71 : f32 to vector<8x10xf32>
    %105 = arith.maximumf %103, %104 : vector<8x10xf32>
    %c2_72 = arith.constant 2 : index
    %c0_73 = arith.constant 0 : index
    %c0_74 = arith.constant 0 : index
    %106 = vector.load %arg6[%c2_72, %c0_73, %c0_74] : memref<4x10x20xf32, #tpu.memory_space<vmem>>, vector<1x10x20xf32>
    %107 = vector.shape_cast %106 : vector<1x10x20xf32> to vector<10x20xf32>
    %cst_75 = arith.constant dense<0.000000e+00> : vector<8x20xf32>
    %108 = tpu.matmul %105, %107, %cst_75 {dimension_numbers = #tpu.dot_dimension_numbers<[1], [0], [0], [1], [0, 0, 1, 1], [], []>} : vector<8x10xf32>, vector<10x20xf32>, vector<8x20xf32> -> vector<8x20xf32>
    %c2_76 = arith.constant 2 : index
    %c0_77 = arith.constant 0 : index
    %c0_78 = arith.constant 0 : index
    %109 = vector.load %arg7[%c2_76, %c0_77, %c0_78] : memref<4x1x20xf32, #tpu.memory_space<vmem>>, vector<1x1x20xf32>
    %110 = vector.shape_cast %109 : vector<1x1x20xf32> to vector<1x20xf32>
    %111 = vector.broadcast %110 : vector<1x20xf32> to vector<8x20xf32>
    %112 = arith.addf %108, %111 : vector<8x20xf32>
    %113 = math.tanh %112 : vector<8x20xf32>
    %c2_79 = arith.constant 2 : index
    %c0_80 = arith.constant 0 : index
    %c0_81 = arith.constant 0 : index
    %114 = vector.load %arg8[%c2_79, %c0_80, %c0_81] : memref<4x20x2xf32, #tpu.memory_space<vmem>>, vector<1x20x2xf32>
    %115 = vector.shape_cast %114 : vector<1x20x2xf32> to vector<20x2xf32>
    %cst_82 = arith.constant dense<0.000000e+00> : vector<8x2xf32>
    %116 = tpu.matmul %113, %115, %cst_82 {dimension_numbers = #tpu.dot_dimension_numbers<[1], [0], [0], [1], [0, 0, 1, 1], [], []>} : vector<8x20xf32>, vector<20x2xf32>, vector<8x2xf32> -> vector<8x2xf32>
    %c2_83 = arith.constant 2 : index
    %c0_84 = arith.constant 0 : index
    %c0_85 = arith.constant 0 : index
    %117 = vector.load %arg9[%c2_83, %c0_84, %c0_85] : memref<4x1x2xf32, #tpu.memory_space<vmem>>, vector<1x1x2xf32>
    %118 = vector.shape_cast %117 : vector<1x1x2xf32> to vector<1x2xf32>
    %119 = vector.broadcast %118 : vector<1x2xf32> to vector<8x2xf32>
    %120 = arith.addf %116, %119 : vector<8x2xf32>
    %121 = vector.extract_strided_slice %120 {offsets = [0, 0], sizes = [8, 1], strides = [1, 1]} : vector<8x2xf32> to vector<8x1xf32>
    %122 = vector.extract_strided_slice %120 {offsets = [0, 1], sizes = [8, 1], strides = [1, 1]} : vector<8x2xf32> to vector<8x1xf32>
    %123 = math.exp %121 : vector<8x1xf32>
    %124 = arith.mulf %123, %43 : vector<8x1xf32>
    %125 = arith.addf %124, %122 : vector<8x1xf32>
    %126 = arith.addf %85, %121 : vector<8x1xf32>
    %c3 = arith.constant 3 : index
    %c0_86 = arith.constant 0 : index
    %c0_87 = arith.constant 0 : index
    %127 = vector.load %arg2[%c3, %c0_86, %c0_87] : memref<4x1x10xf32, #tpu.memory_space<vmem>>, vector<1x1x10xf32>
    %128 = vector.shape_cast %127 : vector<1x1x10xf32> to vector<1x10xf32>
    %129 = vector.broadcast %125 : vector<8x1xf32> to vector<8x10xf32>
    %130 = vector.broadcast %128 : vector<1x10xf32> to vector<8x10xf32>
    %131 = arith.mulf %129, %130 : vector<8x10xf32>
    %c3_88 = arith.constant 3 : index
    %c0_89 = arith.constant 0 : index
    %c0_90 = arith.constant 0 : index
    %132 = vector.load %arg3[%c3_88, %c0_89, %c0_90] : memref<4x1x10xf32, #tpu.memory_space<vmem>>, vector<1x1x10xf32>
    %133 = vector.shape_cast %132 : vector<1x1x10xf32> to vector<1x10xf32>
    %134 = vector.broadcast %133 : vector<1x10xf32> to vector<8x10xf32>
    %135 = arith.addf %131, %134 : vector<8x10xf32>
    %cst_91 = arith.constant 0.000000e+00 : f32
    %136 = vector.broadcast %cst_91 : f32 to vector<8x10xf32>
    %137 = arith.maximumf %135, %136 : vector<8x10xf32>
    %c3_92 = arith.constant 3 : index
    %c0_93 = arith.constant 0 : index
    %c0_94 = arith.constant 0 : index
    %138 = vector.load %arg4[%c3_92, %c0_93, %c0_94] : memref<4x10x10xf32, #tpu.memory_space<vmem>>, vector<1x10x10xf32>
    %139 = vector.shape_cast %138 : vector<1x10x10xf32> to vector<10x10xf32>
    %cst_95 = arith.constant dense<0.000000e+00> : vector<8x10xf32>
    %140 = tpu.matmul %137, %139, %cst_95 {dimension_numbers = #tpu.dot_dimension_numbers<[1], [0], [0], [1], [0, 0, 1, 1], [], []>} : vector<8x10xf32>, vector<10x10xf32>, vector<8x10xf32> -> vector<8x10xf32>
    %c3_96 = arith.constant 3 : index
    %c0_97 = arith.constant 0 : index
    %c0_98 = arith.constant 0 : index
    %141 = vector.load %arg5[%c3_96, %c0_97, %c0_98] : memref<4x1x10xf32, #tpu.memory_space<vmem>>, vector<1x1x10xf32>
    %142 = vector.shape_cast %141 : vector<1x1x10xf32> to vector<1x10xf32>
    %143 = vector.broadcast %142 : vector<1x10xf32> to vector<8x10xf32>
    %144 = arith.addf %140, %143 : vector<8x10xf32>
    %cst_99 = arith.constant 0.000000e+00 : f32
    %145 = vector.broadcast %cst_99 : f32 to vector<8x10xf32>
    %146 = arith.maximumf %144, %145 : vector<8x10xf32>
    %c3_100 = arith.constant 3 : index
    %c0_101 = arith.constant 0 : index
    %c0_102 = arith.constant 0 : index
    %147 = vector.load %arg6[%c3_100, %c0_101, %c0_102] : memref<4x10x20xf32, #tpu.memory_space<vmem>>, vector<1x10x20xf32>
    %148 = vector.shape_cast %147 : vector<1x10x20xf32> to vector<10x20xf32>
    %cst_103 = arith.constant dense<0.000000e+00> : vector<8x20xf32>
    %149 = tpu.matmul %146, %148, %cst_103 {dimension_numbers = #tpu.dot_dimension_numbers<[1], [0], [0], [1], [0, 0, 1, 1], [], []>} : vector<8x10xf32>, vector<10x20xf32>, vector<8x20xf32> -> vector<8x20xf32>
    %c3_104 = arith.constant 3 : index
    %c0_105 = arith.constant 0 : index
    %c0_106 = arith.constant 0 : index
    %150 = vector.load %arg7[%c3_104, %c0_105, %c0_106] : memref<4x1x20xf32, #tpu.memory_space<vmem>>, vector<1x1x20xf32>
    %151 = vector.shape_cast %150 : vector<1x1x20xf32> to vector<1x20xf32>
    %152 = vector.broadcast %151 : vector<1x20xf32> to vector<8x20xf32>
    %153 = arith.addf %149, %152 : vector<8x20xf32>
    %154 = math.tanh %153 : vector<8x20xf32>
    %c3_107 = arith.constant 3 : index
    %c0_108 = arith.constant 0 : index
    %c0_109 = arith.constant 0 : index
    %155 = vector.load %arg8[%c3_107, %c0_108, %c0_109] : memref<4x20x2xf32, #tpu.memory_space<vmem>>, vector<1x20x2xf32>
    %156 = vector.shape_cast %155 : vector<1x20x2xf32> to vector<20x2xf32>
    %cst_110 = arith.constant dense<0.000000e+00> : vector<8x2xf32>
    %157 = tpu.matmul %154, %156, %cst_110 {dimension_numbers = #tpu.dot_dimension_numbers<[1], [0], [0], [1], [0, 0, 1, 1], [], []>} : vector<8x20xf32>, vector<20x2xf32>, vector<8x2xf32> -> vector<8x2xf32>
    %c3_111 = arith.constant 3 : index
    %c0_112 = arith.constant 0 : index
    %c0_113 = arith.constant 0 : index
    %158 = vector.load %arg9[%c3_111, %c0_112, %c0_113] : memref<4x1x2xf32, #tpu.memory_space<vmem>>, vector<1x1x2xf32>
    %159 = vector.shape_cast %158 : vector<1x1x2xf32> to vector<1x2xf32>
    %160 = vector.broadcast %159 : vector<1x2xf32> to vector<8x2xf32>
    %161 = arith.addf %157, %160 : vector<8x2xf32>
    %162 = vector.extract_strided_slice %161 {offsets = [0, 0], sizes = [8, 1], strides = [1, 1]} : vector<8x2xf32> to vector<8x1xf32>
    %163 = vector.extract_strided_slice %161 {offsets = [0, 1], sizes = [8, 1], strides = [1, 1]} : vector<8x2xf32> to vector<8x1xf32>
    %164 = math.exp %162 : vector<8x1xf32>
    %165 = arith.mulf %164, %84 : vector<8x1xf32>
    %166 = arith.addf %165, %163 : vector<8x1xf32>
    %167 = arith.addf %126, %162 : vector<8x1xf32>
    %168 = arith.mulf %125, %125 : vector<8x1xf32>
    %169 = arith.mulf %166, %166 : vector<8x1xf32>
    %170 = arith.addf %168, %169 : vector<8x1xf32>
    %cst_114 = arith.constant 5.000000e-01 : f32
    %171 = vector.broadcast %cst_114 : f32 to vector<8x1xf32>
    %172 = arith.mulf %171, %170 : vector<8x1xf32>
    %cst_115 = arith.constant -1.83787704 : f32
    %173 = vector.broadcast %cst_115 : f32 to vector<8x1xf32>
    %174 = arith.subf %173, %172 : vector<8x1xf32>
    %175 = arith.addf %174, %167 : vector<8x1xf32>
    %cst_116 = arith.constant 0.000000e+00 : f32
    %176 = vector.broadcast %cst_116 : f32 to vector<8x5xf32>
    %177 = tpu.concatenate %175, %125, %166, %176 in 1 : vector<8x1xf32>, vector<8x1xf32>, vector<8x1xf32>, vector<8x5xf32> -> vector<8x8xf32>
    %c0_117 = arith.constant 0 : index
    %c0_118 = arith.constant 0 : index
    %178 = vector.load %arg10[%c0_117, %c0_118] : memref<8x8xf32, #tpu.memory_space<vmem>>, vector<8x8xf32>
    tpu.vector_store %arg10[%c0_117, %c0_118], %177 {strides = array<i32>} : memref<8x8xf32, #tpu.memory_space<vmem>>, vector<8x8xf32>,
    return
  }
  func.func @transform_0(%arg0: i32) -> (i32, i32) {
    %c0_i32 = arith.constant 0 : i32
    %c0_i32_0 = arith.constant 0 : i32
    return %arg0, %c0_i32 : i32, i32
  }
  func.func @transform_1(%arg0: i32) -> (i32, i32, i32) {
    %c0_i32 = arith.constant 0 : i32
    %c0_i32_0 = arith.constant 0 : i32
    %c0_i32_1 = arith.constant 0 : i32
    %c0_i32_2 = arith.constant 0 : i32
    return %c0_i32, %c0_i32_0, %c0_i32_1 : i32, i32, i32
  }
  func.func @transform_2(%arg0: i32) -> (i32, i32, i32) {
    %c0_i32 = arith.constant 0 : i32
    %c0_i32_0 = arith.constant 0 : i32
    %c0_i32_1 = arith.constant 0 : i32
    %c0_i32_2 = arith.constant 0 : i32
    return %c0_i32, %c0_i32_0, %c0_i32_1 : i32, i32, i32
  }
  func.func @transform_3(%arg0: i32) -> (i32, i32, i32) {
    %c0_i32 = arith.constant 0 : i32
    %c0_i32_0 = arith.constant 0 : i32
    %c0_i32_1 = arith.constant 0 : i32
    %c0_i32_2 = arith.constant 0 : i32
    return %c0_i32, %c0_i32_0, %c0_i32_1 : i32, i32, i32
  }
  func.func @transform_4(%arg0: i32) -> (i32, i32, i32) {
    %c0_i32 = arith.constant 0 : i32
    %c0_i32_0 = arith.constant 0 : i32
    %c0_i32_1 = arith.constant 0 : i32
    %c0_i32_2 = arith.constant 0 : i32
    return %c0_i32, %c0_i32_0, %c0_i32_1 : i32, i32, i32
  }
  func.func @transform_5(%arg0: i32) -> (i32, i32, i32) {
    %c0_i32 = arith.constant 0 : i32
    %c0_i32_0 = arith.constant 0 : i32
    %c0_i32_1 = arith.constant 0 : i32
    %c0_i32_2 = arith.constant 0 : i32
    return %c0_i32, %c0_i32_0, %c0_i32_1 : i32, i32, i32
  }
  func.func @transform_6(%arg0: i32) -> (i32, i32, i32) {
    %c0_i32 = arith.constant 0 : i32
    %c0_i32_0 = arith.constant 0 : i32
    %c0_i32_1 = arith.constant 0 : i32
    %c0_i32_2 = arith.constant 0 : i32
    return %c0_i32, %c0_i32_0, %c0_i32_1 : i32, i32, i32
  }
  func.func @transform_7(%arg0: i32) -> (i32, i32, i32) {
    %c0_i32 = arith.constant 0 : i32
    %c0_i32_0 = arith.constant 0 : i32
    %c0_i32_1 = arith.constant 0 : i32
    %c0_i32_2 = arith.constant 0 : i32
    return %c0_i32, %c0_i32_0, %c0_i32_1 : i32, i32, i32
  }
  func.func @transform_8(%arg0: i32) -> (i32, i32, i32) {
    %c0_i32 = arith.constant 0 : i32
    %c0_i32_0 = arith.constant 0 : i32
    %c0_i32_1 = arith.constant 0 : i32
    %c0_i32_2 = arith.constant 0 : i32
    return %c0_i32, %c0_i32_0, %c0_i32_1 : i32, i32, i32
  }
  func.func @transform_9(%arg0: i32) -> (i32, i32) {
    %c0_i32 = arith.constant 0 : i32
    %c0_i32_0 = arith.constant 0 : i32
    return %arg0, %c0_i32 : i32, i32
  }
}

</mosaic_0001>

<llo_original>
// kernel: tpu_custom_call.1
$region0: #{tpu_custom_call.1}
  #allocation0 [shape = 'u32[]', space=smem, size = 0x4, offset = 0x4, fixed_abs, tag = 'smem constant byte address 0x4 - core index']
  #allocation1 [shape = 'u32[144,128]{1,0:T(1,128)}', space=vmem, size = 0x12000, scoped, tag = 'internal scratch']
  %s0 = inlined_call_operand.vmem [shape: f32[8,2], index: 0, kind: input, shape index: {}]
  %s1 = inlined_call_operand.vmem [shape: f32[4,1,10], index: 1, kind: input, shape index: {}]
  %s2 = inlined_call_operand.vmem [shape: f32[4,1,10], index: 2, kind: input, shape index: {}]
  %s3 = inlined_call_operand.vmem [shape: f32[4,10,10], index: 3, kind: input, shape index: {}]
  %s4 = inlined_call_operand.vmem [shape: f32[4,1,10], index: 4, kind: input, shape index: {}]
  %s5 = inlined_call_operand.vmem [shape: f32[4,10,20], index: 5, kind: input, shape index: {}]
  %s6 = inlined_call_operand.vmem [shape: f32[4,1,20], index: 6, kind: input, shape index: {}]
  %s7 = inlined_call_operand.vmem [shape: f32[4,20,2], index: 7, kind: input, shape index: {}]
  %s8 = inlined_call_operand.vmem [shape: f32[4,1,2], index: 8, kind: input, shape index: {}]
  %s9 = inlined_call_operand.hbm [shape: f32[8,8], index: 9, kind: output, shape index: {}]
  %s10 = sld [smem:[#allocation0]]
  $region46: #{tpu_custom_call.1} parent=0
    _
  %s12 = ssub.s32 1, %s10
  %s13 = scalar_select 0, %s12, %s10
  $region1: #{tpu_custom_call.1} parent=0
    #allocation2 [shape = 'u8[4096]{0}', space=vmem, size = 0x1000, scoped, tag = 'output window, operand 0, single buffered']
    #allocation3 [shape = 's32[1]{0}', space=sflag, size = 0x4, scoped, tag = 'scoped memory for tpu_custom_call.1']
    %14 = vsyncpa [#allocation3], 0
    // Predicated region
    $region2: #{tpu_custom_call.1} parent=1 // pred_check
      _
    $region3: #{tpu_custom_call.1} parent=1 // pred_check_branch
      %16 = sbr.rel (0) target = $region5
    $region4: #{tpu_custom_call.1} parent=1 // pred_region
      _
    $region5: #{tpu_custom_call.1} parent=1 // pred_fallthru
      _
    // Predicated region
    $region6: #{tpu_custom_call.1} parent=1 // pred_check
      _
    $region7: #{tpu_custom_call.1} parent=1 // pred_check_branch
      %18 = sbr.rel (0) target = $region9
    $region8: #{tpu_custom_call.1} parent=1 // pred_region
      _
    $region9: #{tpu_custom_call.1} parent=1 // pred_fallthru
      _
    // Predicated region
    $region10: #{tpu_custom_call.1} parent=1 // pred_check
      _
    $region11: #{tpu_custom_call.1} parent=1 // pred_check_branch
      %20 = sbr.rel (0) target = $region13
    $region12: #{tpu_custom_call.1} parent=1 // pred_region
      _
    $region13: #{tpu_custom_call.1} parent=1 // pred_fallthru
      _
    // Predicated region
    $region14: #{tpu_custom_call.1} parent=1 // pred_check
      _
    $region15: #{tpu_custom_call.1} parent=1 // pred_check_branch
      %22 = sbr.rel (0) target = $region17
    $region16: #{tpu_custom_call.1} parent=1 // pred_region
      _
    $region17: #{tpu_custom_call.1} parent=1 // pred_fallthru
      _
    // Predicated region
    $region18: #{tpu_custom_call.1} parent=1 // pred_check
      _
    $region19: #{tpu_custom_call.1} parent=1 // pred_check_branch
      %24 = sbr.rel (0) target = $region21
    $region20: #{tpu_custom_call.1} parent=1 // pred_region
      _
    $region21: #{tpu_custom_call.1} parent=1 // pred_fallthru
      _
    // Predicated region
    $region22: #{tpu_custom_call.1} parent=1 // pred_check
      _
    $region23: #{tpu_custom_call.1} parent=1 // pred_check_branch
      %26 = sbr.rel (0) target = $region25
    $region24: #{tpu_custom_call.1} parent=1 // pred_region
      _
    $region25: #{tpu_custom_call.1} parent=1 // pred_fallthru
      _
    // Predicated region
    $region26: #{tpu_custom_call.1} parent=1 // pred_check
      _
    $region27: #{tpu_custom_call.1} parent=1 // pred_check_branch
      %28 = sbr.rel (0) target = $region29
    $region28: #{tpu_custom_call.1} parent=1 // pred_region
      _
    $region29: #{tpu_custom_call.1} parent=1 // pred_fallthru
      _
    // Predicated region
    $region30: #{tpu_custom_call.1} parent=1 // pred_check
      _
    $region31: #{tpu_custom_call.1} parent=1 // pred_check_branch
      %30 = sbr.rel (0) target = $region33
    $region32: #{tpu_custom_call.1} parent=1 // pred_region
      _
    $region33: #{tpu_custom_call.1} parent=1 // pred_fallthru
      _
    // Predicated region
    $region34: #{tpu_custom_call.1} parent=1 // pred_check
      _
    $region35: #{tpu_custom_call.1} parent=1 // pred_check_branch
      %32 = sbr.rel (0) target = $region37
    $region36: #{tpu_custom_call.1} parent=1 // pred_region
      _
    $region37: #{tpu_custom_call.1} parent=1 // pred_fallthru
      _
    %v33 = vld [vmem:[%s0] sm:$0xff]
    %v34 = vld [vmem:[%s1] sm:$0x1]
    %36 = vset.pattern.permute.xlu0 0
    %37 = vperm.xlu0 %36, %v33
    %v38 = vpop.permute.xlu0 %37
    %v41 = vlaneseq
    %v42 = vshrl.u32 %v41, 7
    %v43 = vsub.s32 0, %v42
    %v44 = vrot.slane %v34, %v43
    %v46 = vmul.f32 %v38, %v44
    %v47 = vld [vmem:[%s2] sm:$0x1]
    %v49 = vlaneseq
    %v50 = vshrl.u32 %v49, 7
    %v51 = vsub.s32 0, %v50
    %v52 = vrot.slane %v47, %v51
    %v54 = vadd.f32 %v46, %v52
    %v55 = vmax.f32 %v54, 0.0
    %v56 = vld [vmem:[%s3] sm:$0xff]
    %v57 = vld [vmem:[%s3 + $0x8] sm:$0x3]
    %v58 = vld [vmem:[%s4] sm:$0x1]
    %v60 = vlaneseq
    %v61 = vshrl.u32 %v60, 7
    %v62 = vsub.s32 0, %v61
    %v63 = vrot.slane %v58, %v62
    %vm65 = vcmask 80896
    %v67 = vsel %vm65, %v55, 0
    %vm69 = vcmask 1041408
    %v71 = vsel %vm69, %v57, 0
    %73 = vmatprep.subr.mxu0 0.0
    %74 = vmatpush1.msra.mxu0 0.0
    %75 = vmatprep.subr.mxu0 0.0
    %76 = vmatpush1.msra.mxu0 0.0
    %77 = vmatprep.subr.mxu0 0.0
    %78 = vmatpush1.msra.mxu0 0.0
    %79 = vmatprep.subr.mxu0 0.0
    %80 = vmatpush1.msra.mxu0 0.0
    %81 = vmatprep.subr.mxu0 0.0
    %82 = vmatpush1.msra.mxu0 0.0
    %83 = vmatprep.subr.mxu0 0.0
    %84 = vmatpush1.msra.mxu0 0.0
    %85 = vmatprep.subr.mxu0 0.0
    %86 = vmatpush1.msra.mxu0 0.0
    %87 = vmatprep.subr.mxu0 0.0
    %88 = vmatpush1.msra.mxu0 0.0
    %89 = vmatprep.subr.mxu0 0.0
    %90 = vmatpush1.msra.mxu0 0.0
    %91 = vmatprep.subr.mxu0 0.0
    %92 = vmatpush1.msra.mxu0 0.0
    %93 = vmatprep.subr.mxu0 0.0
    %94 = vmatpush1.msra.mxu0 0.0
    %95 = vmatprep.subr.mxu0 0.0
    %96 = vmatpush1.msra.mxu0 0.0
    %97 = vmatprep.subr.mxu0 0.0
    %98 = vmatpush1.msra.mxu0 0.0
    %99 = vmatprep.subr.mxu0 0.0
    %100 = vmatpush1.msra.mxu0 0.0
    %101 = vmatprep.subr.mxu0 0.0
    %102 = vmatpush1.msra.mxu0 %v71
    %103 = vmatprep.subr.mxu0 0.0
    %104 = vmatpush1.msra.mxu0 %v56
    %105 = vmatprep.subr.mxu0 0.0
    %106 = vmatpush2.msra.mxu0 0.0
    %107 = vmatprep.subr.mxu0 0.0
    %108 = vmatpush2.msra.mxu0 0.0
    %109 = vmatprep.subr.mxu0 0.0
    %110 = vmatpush2.msra.mxu0 0.0
    %111 = vmatprep.subr.mxu0 0.0
    %112 = vmatpush2.msra.mxu0 0.0
    %113 = vmatprep.subr.mxu0 0.0
    %114 = vmatpush2.msra.mxu0 0.0
    %115 = vmatprep.subr.mxu0 0.0
    %116 = vmatpush2.msra.mxu0 0.0
    %117 = vmatprep.subr.mxu0 0.0
    %118 = vmatpush2.msra.mxu0 0.0
    %119 = vmatprep.subr.mxu0 0.0
    %120 = vmatpush2.msra.mxu0 0.0
    %121 = vmatprep.subr.mxu0 0.0
    %122 = vmatpush2.msra.mxu0 0.0
    %123 = vmatprep.subr.mxu0 0.0
    %124 = vmatpush2.msra.mxu0 0.0
    %125 = vmatprep.subr.mxu0 0.0
    %126 = vmatpush2.msra.mxu0 0.0
    %127 = vmatprep.subr.mxu0 0.0
    %128 = vmatpush2.msra.mxu0 0.0
    %129 = vmatprep.subr.mxu0 0.0
    %130 = vmatpush2.msra.mxu0 0.0
    %131 = vmatprep.subr.mxu0 0.0
    %132 = vmatpush2.msra.mxu0 0.0
    %133 = vmatprep.subr.mxu0 0.0
    %134 = vmatpush2.msra.mxu0 0.0
    %135 = vmatprep.subr.mxu0 0.0
    %136 = vmatpush2.msra.mxu0 0.0
    %137 = vmatprep.mubr.f32.mxu0 0.0
    %138 = vmatmul.mubr.f32.gmra.mxu0 %v67
    %v139 = vpop.f32.mrf.mxu0
    %v140 = vadd.f32 %v63, %v139
    %v141 = vpop.f32.mrf.mxu0
    %142 = vdwg.mxu0
    %v143 = vmax.f32 %v140, 0.0
    %v144 = vld [vmem:[%s5] sm:$0xff]
    %v145 = vld [vmem:[%s5 + $0x8] sm:$0x3]
    %v146 = vld [vmem:[%s6] sm:$0x1]
    %v148 = vlaneseq
    %v149 = vshrl.u32 %v148, 7
    %v150 = vsub.s32 0, %v149
    %v151 = vrot.slane %v146, %v150
    %v154 = vsel %vm65, %v143, 0
    %v157 = vsel %vm69, %v145, 0
    %159 = vmatprep.subr.mxu0 0.0
    %160 = vmatpush1.msra.mxu0 0.0
    %161 = vmatprep.subr.mxu0 0.0
    %162 = vmatpush1.msra.mxu0 0.0
    %163 = vmatprep.subr.mxu0 0.0
    %164 = vmatpush1.msra.mxu0 0.0
    %165 = vmatprep.subr.mxu0 0.0
    %166 = vmatpush1.msra.mxu0 0.0
    %167 = vmatprep.subr.mxu0 0.0
    %168 = vmatpush1.msra.mxu0 0.0
    %169 = vmatprep.subr.mxu0 0.0
    %170 = vmatpush1.msra.mxu0 0.0
    %171 = vmatprep.subr.mxu0 0.0
    %172 = vmatpush1.msra.mxu0 0.0
    %173 = vmatprep.subr.mxu0 0.0
    %174 = vmatpush1.msra.mxu0 0.0
    %175 = vmatprep.subr.mxu0 0.0
    %176 = vmatpush1.msra.mxu0 0.0
    %177 = vmatprep.subr.mxu0 0.0
    %178 = vmatpush1.msra.mxu0 0.0
    %179 = vmatprep.subr.mxu0 0.0
    %180 = vmatpush1.msra.mxu0 0.0
    %181 = vmatprep.subr.mxu0 0.0
    %182 = vmatpush1.msra.mxu0 0.0
    %183 = vmatprep.subr.mxu0 0.0
    %184 = vmatpush1.msra.mxu0 0.0
    %185 = vmatprep.subr.mxu0 0.0
    %186 = vmatpush1.msra.mxu0 0.0
    %187 = vmatprep.subr.mxu0 0.0
    %188 = vmatpush1.msra.mxu0 %v157
    %189 = vmatprep.subr.mxu0 0.0
    %190 = vmatpush1.msra.mxu0 %v144
    %191 = vmatprep.subr.mxu0 0.0
    %192 = vmatpush2.msra.mxu0 0.0
    %193 = vmatprep.subr.mxu0 0.0
    %194 = vmatpush2.msra.mxu0 0.0
    %195 = vmatprep.subr.mxu0 0.0
    %196 = vmatpush2.msra.mxu0 0.0
    %197 = vmatprep.subr.mxu0 0.0
    %198 = vmatpush2.msra.mxu0 0.0
    %199 = vmatprep.subr.mxu0 0.0
    %200 = vmatpush2.msra.mxu0 0.0
    %201 = vmatprep.subr.mxu0 0.0
    %202 = vmatpush2.msra.mxu0 0.0
    %203 = vmatprep.subr.mxu0 0.0
    %204 = vmatpush2.msra.mxu0 0.0
    %205 = vmatprep.subr.mxu0 0.0
    %206 = vmatpush2.msra.mxu0 0.0
    %207 = vmatprep.subr.mxu0 0.0
    %208 = vmatpush2.msra.mxu0 0.0
    %209 = vmatprep.subr.mxu0 0.0
    %210 = vmatpush2.msra.mxu0 0.0
    %211 = vmatprep.subr.mxu0 0.0
    %212 = vmatpush2.msra.mxu0 0.0
    %213 = vmatprep.subr.mxu0 0.0
    %214 = vmatpush2.msra.mxu0 0.0
    %215 = vmatprep.subr.mxu0 0.0
    %216 = vmatpush2.msra.mxu0 0.0
    %217 = vmatprep.subr.mxu0 0.0
    %218 = vmatpush2.msra.mxu0 0.0
    %219 = vmatprep.subr.mxu0 0.0
    %220 = vmatpush2.msra.mxu0 0.0
    %221 = vmatprep.subr.mxu0 0.0
    %222 = vmatpush2.msra.mxu0 0.0
    %223 = vmatprep.mubr.f32.mxu0 0.0
    %224 = vmatmul.mubr.f32.gmra.mxu0 %v154
    %v225 = vpop.f32.mrf.mxu0
    %v226 = vadd.f32 %v151, %v225
    %v227 = vpop.f32.mrf.mxu0
    %228 = vdwg.mxu0
    %v229 = vtanh.pop %v226
    %v230 = vld [vmem:[%s7] sm:$0xff]
    %v231 = vld [vmem:[%s7 + $0x8] sm:$0xff]
    %v232 = vld [vmem:[%s7 + $0x10] sm:$0xf]
    %v233 = vld [vmem:[%s8] sm:$0x1]
    %v235 = vlaneseq
    %v236 = vshrl.u32 %v235, 7
    %v237 = vsub.s32 0, %v236
    %v238 = vrot.slane %v233, %v237
    %vm240 = vcmask 162816
    %v242 = vsel %vm240, %v229, 0
    %vm244 = vcmask 1043456
    %v246 = vsel %vm244, %v232, 0
    %248 = vmatprep.subr.mxu0 0.0
    %249 = vmatpush1.msra.mxu0 0.0
    %250 = vmatprep.subr.mxu0 0.0
    %251 = vmatpush1.msra.mxu0 0.0
    %252 = vmatprep.subr.mxu0 0.0
    %253 = vmatpush1.msra.mxu0 0.0
    %254 = vmatprep.subr.mxu0 0.0
    %255 = vmatpush1.msra.mxu0 0.0
    %256 = vmatprep.subr.mxu0 0.0
    %257 = vmatpush1.msra.mxu0 0.0
    %258 = vmatprep.subr.mxu0 0.0
    %259 = vmatpush1.msra.mxu0 0.0
    %260 = vmatprep.subr.mxu0 0.0
    %261 = vmatpush1.msra.mxu0 0.0
    %262 = vmatprep.subr.mxu0 0.0
    %263 = vmatpush1.msra.mxu0 0.0
    %264 = vmatprep.subr.mxu0 0.0
    %265 = vmatpush1.msra.mxu0 0.0
    %266 = vmatprep.subr.mxu0 0.0
    %267 = vmatpush1.msra.mxu0 0.0
    %268 = vmatprep.subr.mxu0 0.0
    %269 = vmatpush1.msra.mxu0 0.0
    %270 = vmatprep.subr.mxu0 0.0
    %271 = vmatpush1.msra.mxu0 0.0
    %272 = vmatprep.subr.mxu0 0.0
    %273 = vmatpush1.msra.mxu0 0.0
    %274 = vmatprep.subr.mxu0 0.0
    %275 = vmatpush1.msra.mxu0 %v246
    %276 = vmatprep.subr.mxu0 0.0
    %277 = vmatpush1.msra.mxu0 %v231
    %278 = vmatprep.subr.mxu0 0.0
    %279 = vmatpush1.msra.mxu0 %v230
    %280 = vmatprep.subr.mxu0 0.0
    %281 = vmatpush2.msra.mxu0 0.0
    %282 = vmatprep.subr.mxu0 0.0
    %283 = vmatpush2.msra.mxu0 0.0
    %284 = vmatprep.subr.mxu0 0.0
    %285 = vmatpush2.msra.mxu0 0.0
    %286 = vmatprep.subr.mxu0 0.0
    %287 = vmatpush2.msra.mxu0 0.0
    %288 = vmatprep.subr.mxu0 0.0
    %289 = vmatpush2.msra.mxu0 0.0
    %290 = vmatprep.subr.mxu0 0.0
    %291 = vmatpush2.msra.mxu0 0.0
    %292 = vmatprep.subr.mxu0 0.0
    %293 = vmatpush2.msra.mxu0 0.0
    %294 = vmatprep.subr.mxu0 0.0
    %295 = vmatpush2.msra.mxu0 0.0
    %296 = vmatprep.subr.mxu0 0.0
    %297 = vmatpush2.msra.mxu0 0.0
    %298 = vmatprep.subr.mxu0 0.0
    %299 = vmatpush2.msra.mxu0 0.0
    %300 = vmatprep.subr.mxu0 0.0
    %301 = vmatpush2.msra.mxu0 0.0
    %302 = vmatprep.subr.mxu0 0.0
    %303 = vmatpush2.msra.mxu0 0.0
    %304 = vmatprep.subr.mxu0 0.0
    %305 = vmatpush2.msra.mxu0 0.0
    %306 = vmatprep.subr.mxu0 0.0
    %307 = vmatpush2.msra.mxu0 0.0
    %308 = vmatprep.subr.mxu0 0.0
    %309 = vmatpush2.msra.mxu0 0.0
    %310 = vmatprep.subr.mxu0 0.0
    %311 = vmatpush2.msra.mxu0 0.0
    %312 = vmatprep.mubr.f32.mxu0 0.0
    %313 = vmatmul.mubr.f32.gmra.mxu0 %v242
    %v314 = vpop.f32.mrf.mxu0
    %v315 = vadd.f32 %v238, %v314
    %v316 = vpop.f32.mrf.mxu0
    %317 = vdwg.mxu0
    %v318 = vmul.f32 %v315, 1.442695
    %v319 = vpow.pop %v318
    %320 = vrot.lane.b32.xlu0 %v33, 127
    %v321 = vpop.permute.xlu0 %320
    %v323 = vmul.f32 %v319, %v321
    %325 = vrot.lane.b32.xlu0 %v315, 127
    %v326 = vpop.permute.xlu0 %325
    %v328 = vadd.f32 %v323, %v326
    %v329 = vadd.f32 %v315, 0.0
    %s330 = scalar_lea.vmem %s1, 1
    %v331 = vld [vmem:[%s330] sm:$0x1]
    %333 = vset.pattern.permute.xlu0 0
    %334 = vperm.xlu0 %333, %v328
    %v335 = vpop.permute.xlu0 %334
    %v338 = vlaneseq
    %v339 = vshrl.u32 %v338, 7
    %v340 = vsub.s32 0, %v339
    %v341 = vrot.slane %v331, %v340
    %v343 = vmul.f32 %v335, %v341
    %s344 = scalar_lea.vmem %s2, 1
    %v345 = vld [vmem:[%s344] sm:$0x1]
    %v347 = vlaneseq
    %v348 = vshrl.u32 %v347, 7
    %v349 = vsub.s32 0, %v348
    %v350 = vrot.slane %v345, %v349
    %v352 = vadd.f32 %v343, %v350
    %v353 = vmax.f32 %v352, 0.0
    %s354 = scalar_lea.vmem %s3, 16
    %v355 = vld [vmem:[%s354] sm:$0xff]
    %v356 = vld [vmem:[%s354 + $0x8] sm:$0x3]
    %s357 = scalar_lea.vmem %s4, 1
    %v358 = vld [vmem:[%s357] sm:$0x1]
    %v360 = vlaneseq
    %v361 = vshrl.u32 %v360, 7
    %v362 = vsub.s32 0, %v361
    %v363 = vrot.slane %v358, %v362
    %v366 = vsel %vm65, %v353, 0
    %v369 = vsel %vm69, %v356, 0
    %371 = vmatprep.subr.mxu0 0.0
    %372 = vmatpush1.msra.mxu0 0.0
    %373 = vmatprep.subr.mxu0 0.0
    %374 = vmatpush1.msra.mxu0 0.0
    %375 = vmatprep.subr.mxu0 0.0
    %376 = vmatpush1.msra.mxu0 0.0
    %377 = vmatprep.subr.mxu0 0.0
    %378 = vmatpush1.msra.mxu0 0.0
    %379 = vmatprep.subr.mxu0 0.0
    %380 = vmatpush1.msra.mxu0 0.0
    %381 = vmatprep.subr.mxu0 0.0
    %382 = vmatpush1.msra.mxu0 0.0
    %383 = vmatprep.subr.mxu0 0.0
    %384 = vmatpush1.msra.mxu0 0.0
    %385 = vmatprep.subr.mxu0 0.0
    %386 = vmatpush1.msra.mxu0 0.0
    %387 = vmatprep.subr.mxu0 0.0
    %388 = vmatpush1.msra.mxu0 0.0
    %389 = vmatprep.subr.mxu0 0.0
    %390 = vmatpush1.msra.mxu0 0.0
    %391 = vmatprep.subr.mxu0 0.0
    %392 = vmatpush1.msra.mxu0 0.0
    %393 = vmatprep.subr.mxu0 0.0
    %394 = vmatpush1.msra.mxu0 0.0
    %395 = vmatprep.subr.mxu0 0.0
    %396 = vmatpush1.msra.mxu0 0.0
    %397 = vmatprep.subr.mxu0 0.0
    %398 = vmatpush1.msra.mxu0 0.0
    %399 = vmatprep.subr.mxu0 0.0
    %400 = vmatpush1.msra.mxu0 %v369
    %401 = vmatprep.subr.mxu0 0.0
    %402 = vmatpush1.msra.mxu0 %v355
    %403 = vmatprep.subr.mxu0 0.0
    %404 = vmatpush2.msra.mxu0 0.0
    %405 = vmatprep.subr.mxu0 0.0
    %406 = vmatpush2.msra.mxu0 0.0
    %407 = vmatprep.subr.mxu0 0.0
    %408 = vmatpush2.msra.mxu0 0.0
    %409 = vmatprep.subr.mxu0 0.0
    %410 = vmatpush2.msra.mxu0 0.0
    %411 = vmatprep.subr.mxu0 0.0
    %412 = vmatpush2.msra.mxu0 0.0
    %413 = vmatprep.subr.mxu0 0.0
    %414 = vmatpush2.msra.mxu0 0.0
    %415 = vmatprep.subr.mxu0 0.0
    %416 = vmatpush2.msra.mxu0 0.0
    %417 = vmatprep.subr.mxu0 0.0
    %418 = vmatpush2.msra.mxu0 0.0
    %419 = vmatprep.subr.mxu0 0.0
    %420 = vmatpush2.msra.mxu0 0.0
    %421 = vmatprep.subr.mxu0 0.0
    %422 = vmatpush2.msra.mxu0 0.0
    %423 = vmatprep.subr.mxu0 0.0
    %424 = vmatpush2.msra.mxu0 0.0
    %425 = vmatprep.subr.mxu0 0.0
    %426 = vmatpush2.msra.mxu0 0.0
    %427 = vmatprep.subr.mxu0 0.0
    %428 = vmatpush2.msra.mxu0 0.0
    %429 = vmatprep.subr.mxu0 0.0
    %430 = vmatpush2.msra.mxu0 0.0
    %431 = vmatprep.subr.mxu0 0.0
    %432 = vmatpush2.msra.mxu0 0.0
    %433 = vmatprep.subr.mxu0 0.0
    %434 = vmatpush2.msra.mxu0 0.0
    %435 = vmatprep.mubr.f32.mxu0 0.0
    %436 = vmatmul.mubr.f32.gmra.mxu0 %v366
    %v437 = vpop.f32.mrf.mxu0
    %v438 = vadd.f32 %v363, %v437
    %v439 = vpop.f32.mrf.mxu0
    %440 = vdwg.mxu0
    %v441 = vmax.f32 %v438, 0.0
    %s442 = scalar_lea.vmem %s5, 16
    %v443 = vld [vmem:[%s442] sm:$0xff]
    %v444 = vld [vmem:[%s442 + $0x8] sm:$0x3]
    %s445 = scalar_lea.vmem %s6, 1
    %v446 = vld [vmem:[%s445] sm:$0x1]
    %v448 = vlaneseq
    %v449 = vshrl.u32 %v448, 7
    %v450 = vsub.s32 0, %v449
    %v451 = vrot.slane %v446, %v450
    %v454 = vsel %vm65, %v441, 0
    %v457 = vsel %vm69, %v444, 0
    %459 = vmatprep.subr.mxu0 0.0
    %460 = vmatpush1.msra.mxu0 0.0
    %461 = vmatprep.subr.mxu0 0.0
    %462 = vmatpush1.msra.mxu0 0.0
    %463 = vmatprep.subr.mxu0 0.0
    %464 = vmatpush1.msra.mxu0 0.0
    %465 = vmatprep.subr.mxu0 0.0
    %466 = vmatpush1.msra.mxu0 0.0
    %467 = vmatprep.subr.mxu0 0.0
    %468 = vmatpush1.msra.mxu0 0.0
    %469 = vmatprep.subr.mxu0 0.0
    %470 = vmatpush1.msra.mxu0 0.0
    %471 = vmatprep.subr.mxu0 0.0
    %472 = vmatpush1.msra.mxu0 0.0
    %473 = vmatprep.subr.mxu0 0.0
    %474 = vmatpush1.msra.mxu0 0.0
    %475 = vmatprep.subr.mxu0 0.0
    %476 = vmatpush1.msra.mxu0 0.0
    %477 = vmatprep.subr.mxu0 0.0
    %478 = vmatpush1.msra.mxu0 0.0
    %479 = vmatprep.subr.mxu0 0.0
    %480 = vmatpush1.msra.mxu0 0.0
    %481 = vmatprep.subr.mxu0 0.0
    %482 = vmatpush1.msra.mxu0 0.0
    %483 = vmatprep.subr.mxu0 0.0
    %484 = vmatpush1.msra.mxu0 0.0
    %485 = vmatprep.subr.mxu0 0.0
    %486 = vmatpush1.msra.mxu0 0.0
    %487 = vmatprep.subr.mxu0 0.0
    %488 = vmatpush1.msra.mxu0 %v457
    %489 = vmatprep.subr.mxu0 0.0
    %490 = vmatpush1.msra.mxu0 %v443
    %491 = vmatprep.subr.mxu0 0.0
    %492 = vmatpush2.msra.mxu0 0.0
    %493 = vmatprep.subr.mxu0 0.0
    %494 = vmatpush2.msra.mxu0 0.0
    %495 = vmatprep.subr.mxu0 0.0
    %496 = vmatpush2.msra.mxu0 0.0
    %497 = vmatprep.subr.mxu0 0.0
    %498 = vmatpush2.msra.mxu0 0.0
    %499 = vmatprep.subr.mxu0 0.0
    %500 = vmatpush2.msra.mxu0 0.0
    %501 = vmatprep.subr.mxu0 0.0
    %502 = vmatpush2.msra.mxu0 0.0
    %503 = vmatprep.subr.mxu0 0.0
    %504 = vmatpush2.msra.mxu0 0.0
    %505 = vmatprep.subr.mxu0 0.0
    %506 = vmatpush2.msra.mxu0 0.0
    %507 = vmatprep.subr.mxu0 0.0
    %508 = vmatpush2.msra.mxu0 0.0
    %509 = vmatprep.subr.mxu0 0.0
    %510 = vmatpush2.msra.mxu0 0.0
    %511 = vmatprep.subr.mxu0 0.0
    %512 = vmatpush2.msra.mxu0 0.0
    %513 = vmatprep.subr.mxu0 0.0
    %514 = vmatpush2.msra.mxu0 0.0
    %515 = vmatprep.subr.mxu0 0.0
    %516 = vmatpush2.msra.mxu0 0.0
    %517 = vmatprep.subr.mxu0 0.0
    %518 = vmatpush2.msra.mxu0 0.0
    %519 = vmatprep.subr.mxu0 0.0
    %520 = vmatpush2.msra.mxu0 0.0
    %521 = vmatprep.subr.mxu0 0.0
    %522 = vmatpush2.msra.mxu0 0.0
    %523 = vmatprep.mubr.f32.mxu0 0.0
    %524 = vmatmul.mubr.f32.gmra.mxu0 %v454
    %v525 = vpop.f32.mrf.mxu0
    %v526 = vadd.f32 %v451, %v525
    %v527 = vpop.f32.mrf.mxu0
    %528 = vdwg.mxu0
    %v529 = vtanh.pop %v526
    %s530 = scalar_lea.vmem %s7, 24
    %v531 = vld [vmem:[%s530] sm:$0xff]
    %v532 = vld [vmem:[%s530 + $0x8] sm:$0xff]
    %v533 = vld [vmem:[%s530 + $0x10] sm:$0xf]
    %s534 = scalar_lea.vmem %s8, 1
    %v535 = vld [vmem:[%s534] sm:$0x1]
    %v537 = vlaneseq
    %v538 = vshrl.u32 %v537, 7
    %v539 = vsub.s32 0, %v538
    %v540 = vrot.slane %v535, %v539
    %v543 = vsel %vm240, %v529, 0
    %v546 = vsel %vm244, %v533, 0
    %548 = vmatprep.subr.mxu0 0.0
    %549 = vmatpush1.msra.mxu0 0.0
    %550 = vmatprep.subr.mxu0 0.0
    %551 = vmatpush1.msra.mxu0 0.0
    %552 = vmatprep.subr.mxu0 0.0
    %553 = vmatpush1.msra.mxu0 0.0
    %554 = vmatprep.subr.mxu0 0.0
    %555 = vmatpush1.msra.mxu0 0.0
    %556 = vmatprep.subr.mxu0 0.0
    %557 = vmatpush1.msra.mxu0 0.0
    %558 = vmatprep.subr.mxu0 0.0
    %559 = vmatpush1.msra.mxu0 0.0
    %560 = vmatprep.subr.mxu0 0.0
    %561 = vmatpush1.msra.mxu0 0.0
    %562 = vmatprep.subr.mxu0 0.0
    %563 = vmatpush1.msra.mxu0 0.0
    %564 = vmatprep.subr.mxu0 0.0
    %565 = vmatpush1.msra.mxu0 0.0
    %566 = vmatprep.subr.mxu0 0.0
    %567 = vmatpush1.msra.mxu0 0.0
    %568 = vmatprep.subr.mxu0 0.0
    %569 = vmatpush1.msra.mxu0 0.0
    %570 = vmatprep.subr.mxu0 0.0
    %571 = vmatpush1.msra.mxu0 0.0
    %572 = vmatprep.subr.mxu0 0.0
    %573 = vmatpush1.msra.mxu0 0.0
    %574 = vmatprep.subr.mxu0 0.0
    %575 = vmatpush1.msra.mxu0 %v546
    %576 = vmatprep.subr.mxu0 0.0
    %577 = vmatpush1.msra.mxu0 %v532
    %578 = vmatprep.subr.mxu0 0.0
    %579 = vmatpush1.msra.mxu0 %v531
    %580 = vmatprep.subr.mxu0 0.0
    %581 = vmatpush2.msra.mxu0 0.0
    %582 = vmatprep.subr.mxu0 0.0
    %583 = vmatpush2.msra.mxu0 0.0
    %584 = vmatprep.subr.mxu0 0.0
    %585 = vmatpush2.msra.mxu0 0.0
    %586 = vmatprep.subr.mxu0 0.0
    %587 = vmatpush2.msra.mxu0 0.0
    %588 = vmatprep.subr.mxu0 0.0
    %589 = vmatpush2.msra.mxu0 0.0
    %590 = vmatprep.subr.mxu0 0.0
    %591 = vmatpush2.msra.mxu0 0.0
    %592 = vmatprep.subr.mxu0 0.0
    %593 = vmatpush2.msra.mxu0 0.0
    %594 = vmatprep.subr.mxu0 0.0
    %595 = vmatpush2.msra.mxu0 0.0
    %596 = vmatprep.subr.mxu0 0.0
    %597 = vmatpush2.msra.mxu0 0.0
    %598 = vmatprep.subr.mxu0 0.0
    %599 = vmatpush2.msra.mxu0 0.0
    %600 = vmatprep.subr.mxu0 0.0
    %601 = vmatpush2.msra.mxu0 0.0
    %602 = vmatprep.subr.mxu0 0.0
    %603 = vmatpush2.msra.mxu0 0.0
    %604 = vmatprep.subr.mxu0 0.0
    %605 = vmatpush2.msra.mxu0 0.0
    %606 = vmatprep.subr.mxu0 0.0
    %607 = vmatpush2.msra.mxu0 0.0
    %608 = vmatprep.subr.mxu0 0.0
    %609 = vmatpush2.msra.mxu0 0.0
    %610 = vmatprep.subr.mxu0 0.0
    %611 = vmatpush2.msra.mxu0 0.0
    %612 = vmatprep.mubr.f32.mxu0 0.0
    %613 = vmatmul.mubr.f32.gmra.mxu0 %v543
    %v614 = vpop.f32.mrf.mxu0
    %v615 = vadd.f32 %v540, %v614
    %v616 = vpop.f32.mrf.mxu0
    %617 = vdwg.mxu0
    %v618 = vmul.f32 %v615, 1.442695
    %v619 = vpow.pop %v618
    %v620 = vmul.f32 %v619, %v33
    %622 = vrot.lane.b32.xlu0 %v615, 127
    %v623 = vpop.permute.xlu0 %622
    %v625 = vadd.f32 %v620, %v623
    %v626 = vadd.f32 %v329, %v615
    %s627 = scalar_lea.vmem %s1, 2
    %v628 = vld [vmem:[%s627] sm:$0x1]
    %630 = vset.pattern.permute.xlu0 0
    %631 = vperm.xlu0 %630, %v625
    %v632 = vpop.permute.xlu0 %631
    %v635 = vlaneseq
    %v636 = vshrl.u32 %v635, 7
    %v637 = vsub.s32 0, %v636
    %v638 = vrot.slane %v628, %v637
    %v640 = vmul.f32 %v632, %v638
    %s641 = scalar_lea.vmem %s2, 2
    %v642 = vld [vmem:[%s641] sm:$0x1]
    %v644 = vlaneseq
    %v645 = vshrl.u32 %v644, 7
    %v646 = vsub.s32 0, %v645
    %v647 = vrot.slane %v642, %v646
    %v649 = vadd.f32 %v640, %v647
    %v650 = vmax.f32 %v649, 0.0
    %s651 = scalar_lea.vmem %s3, 32
    %v652 = vld [vmem:[%s651] sm:$0xff]
    %v653 = vld [vmem:[%s651 + $0x8] sm:$0x3]
    %s654 = scalar_lea.vmem %s4, 2
    %v655 = vld [vmem:[%s654] sm:$0x1]
    %v657 = vlaneseq
    %v658 = vshrl.u32 %v657, 7
    %v659 = vsub.s32 0, %v658
    %v660 = vrot.slane %v655, %v659
    %v663 = vsel %vm65, %v650, 0
    %v666 = vsel %vm69, %v653, 0
    %668 = vmatprep.subr.mxu0 0.0
    %669 = vmatpush1.msra.mxu0 0.0
    %670 = vmatprep.subr.mxu0 0.0
    %671 = vmatpush1.msra.mxu0 0.0
    %672 = vmatprep.subr.mxu0 0.0
    %673 = vmatpush1.msra.mxu0 0.0
    %674 = vmatprep.subr.mxu0 0.0
    %675 = vmatpush1.msra.mxu0 0.0
    %676 = vmatprep.subr.mxu0 0.0
    %677 = vmatpush1.msra.mxu0 0.0
    %678 = vmatprep.subr.mxu0 0.0
    %679 = vmatpush1.msra.mxu0 0.0
    %680 = vmatprep.subr.mxu0 0.0
    %681 = vmatpush1.msra.mxu0 0.0
    %682 = vmatprep.subr.mxu0 0.0
    %683 = vmatpush1.msra.mxu0 0.0
    %684 = vmatprep.subr.mxu0 0.0
    %685 = vmatpush1.msra.mxu0 0.0
    %686 = vmatprep.subr.mxu0 0.0
    %687 = vmatpush1.msra.mxu0 0.0
    %688 = vmatprep.subr.mxu0 0.0
    %689 = vmatpush1.msra.mxu0 0.0
    %690 = vmatprep.subr.mxu0 0.0
    %691 = vmatpush1.msra.mxu0 0.0
    %692 = vmatprep.subr.mxu0 0.0
    %693 = vmatpush1.msra.mxu0 0.0
    %694 = vmatprep.subr.mxu0 0.0
    %695 = vmatpush1.msra.mxu0 0.0
    %696 = vmatprep.subr.mxu0 0.0
    %697 = vmatpush1.msra.mxu0 %v666
    %698 = vmatprep.subr.mxu0 0.0
    %699 = vmatpush1.msra.mxu0 %v652
    %700 = vmatprep.subr.mxu0 0.0
    %701 = vmatpush2.msra.mxu0 0.0
    %702 = vmatprep.subr.mxu0 0.0
    %703 = vmatpush2.msra.mxu0 0.0
    %704 = vmatprep.subr.mxu0 0.0
    %705 = vmatpush2.msra.mxu0 0.0
    %706 = vmatprep.subr.mxu0 0.0
    %707 = vmatpush2.msra.mxu0 0.0
    %708 = vmatprep.subr.mxu0 0.0
    %709 = vmatpush2.msra.mxu0 0.0
    %710 = vmatprep.subr.mxu0 0.0
    %711 = vmatpush2.msra.mxu0 0.0
    %712 = vmatprep.subr.mxu0 0.0
    %713 = vmatpush2.msra.mxu0 0.0
    %714 = vmatprep.subr.mxu0 0.0
    %715 = vmatpush2.msra.mxu0 0.0
    %716 = vmatprep.subr.mxu0 0.0
    %717 = vmatpush2.msra.mxu0 0.0
    %718 = vmatprep.subr.mxu0 0.0
    %719 = vmatpush2.msra.mxu0 0.0
    %720 = vmatprep.subr.mxu0 0.0
    %721 = vmatpush2.msra.mxu0 0.0
    %722 = vmatprep.subr.mxu0 0.0
    %723 = vmatpush2.msra.mxu0 0.0
    %724 = vmatprep.subr.mxu0 0.0
    %725 = vmatpush2.msra.mxu0 0.0
    %726 = vmatprep.subr.mxu0 0.0
    %727 = vmatpush2.msra.mxu0 0.0
    %728 = vmatprep.subr.mxu0 0.0
    %729 = vmatpush2.msra.mxu0 0.0
    %730 = vmatprep.subr.mxu0 0.0
    %731 = vmatpush2.msra.mxu0 0.0
    %732 = vmatprep.mubr.f32.mxu0 0.0
    %733 = vmatmul.mubr.f32.gmra.mxu0 %v663
    %v734 = vpop.f32.mrf.mxu0
    %v735 = vadd.f32 %v660, %v734
    %v736 = vpop.f32.mrf.mxu0
    %737 = vdwg.mxu0
    %v738 = vmax.f32 %v735, 0.0
    %s739 = scalar_lea.vmem %s5, 32
    %v740 = vld [vmem:[%s739] sm:$0xff]
    %v741 = vld [vmem:[%s739 + $0x8] sm:$0x3]
    %s742 = scalar_lea.vmem %s6, 2
    %v743 = vld [vmem:[%s742] sm:$0x1]
    %v745 = vlaneseq
    %v746 = vshrl.u32 %v745, 7
    %v747 = vsub.s32 0, %v746
    %v748 = vrot.slane %v743, %v747
    %v751 = vsel %vm65, %v738, 0
    %v754 = vsel %vm69, %v741, 0
    %756 = vmatprep.subr.mxu0 0.0
    %757 = vmatpush1.msra.mxu0 0.0
    %758 = vmatprep.subr.mxu0 0.0
    %759 = vmatpush1.msra.mxu0 0.0
    %760 = vmatprep.subr.mxu0 0.0
    %761 = vmatpush1.msra.mxu0 0.0
    %762 = vmatprep.subr.mxu0 0.0
    %763 = vmatpush1.msra.mxu0 0.0
    %764 = vmatprep.subr.mxu0 0.0
    %765 = vmatpush1.msra.mxu0 0.0
    %766 = vmatprep.subr.mxu0 0.0
    %767 = vmatpush1.msra.mxu0 0.0
    %768 = vmatprep.subr.mxu0 0.0
    %769 = vmatpush1.msra.mxu0 0.0
    %770 = vmatprep.subr.mxu0 0.0
    %771 = vmatpush1.msra.mxu0 0.0
    %772 = vmatprep.subr.mxu0 0.0
    %773 = vmatpush1.msra.mxu0 0.0
    %774 = vmatprep.subr.mxu0 0.0
    %775 = vmatpush1.msra.mxu0 0.0
    %776 = vmatprep.subr.mxu0 0.0
    %777 = vmatpush1.msra.mxu0 0.0
    %778 = vmatprep.subr.mxu0 0.0
    %779 = vmatpush1.msra.mxu0 0.0
    %780 = vmatprep.subr.mxu0 0.0
    %781 = vmatpush1.msra.mxu0 0.0
    %782 = vmatprep.subr.mxu0 0.0
    %783 = vmatpush1.msra.mxu0 0.0
    %784 = vmatprep.subr.mxu0 0.0
    %785 = vmatpush1.msra.mxu0 %v754
    %786 = vmatprep.subr.mxu0 0.0
    %787 = vmatpush1.msra.mxu0 %v740
    %788 = vmatprep.subr.mxu0 0.0
    %789 = vmatpush2.msra.mxu0 0.0
    %790 = vmatprep.subr.mxu0 0.0
    %791 = vmatpush2.msra.mxu0 0.0
    %792 = vmatprep.subr.mxu0 0.0
    %793 = vmatpush2.msra.mxu0 0.0
    %794 = vmatprep.subr.mxu0 0.0
    %795 = vmatpush2.msra.mxu0 0.0
    %796 = vmatprep.subr.mxu0 0.0
    %797 = vmatpush2.msra.mxu0 0.0
    %798 = vmatprep.subr.mxu0 0.0
    %799 = vmatpush2.msra.mxu0 0.0
    %800 = vmatprep.subr.mxu0 0.0
    %801 = vmatpush2.msra.mxu0 0.0
    %802 = vmatprep.subr.mxu0 0.0
    %803 = vmatpush2.msra.mxu0 0.0
    %804 = vmatprep.subr.mxu0 0.0
    %805 = vmatpush2.msra.mxu0 0.0
    %806 = vmatprep.subr.mxu0 0.0
    %807 = vmatpush2.msra.mxu0 0.0
    %808 = vmatprep.subr.mxu0 0.0
    %809 = vmatpush2.msra.mxu0 0.0
    %810 = vmatprep.subr.mxu0 0.0
    %811 = vmatpush2.msra.mxu0 0.0
    %812 = vmatprep.subr.mxu0 0.0
    %813 = vmatpush2.msra.mxu0 0.0
    %814 = vmatprep.subr.mxu0 0.0
    %815 = vmatpush2.msra.mxu0 0.0
    %816 = vmatprep.subr.mxu0 0.0
    %817 = vmatpush2.msra.mxu0 0.0
    %818 = vmatprep.subr.mxu0 0.0
    %819 = vmatpush2.msra.mxu0 0.0
    %820 = vmatprep.mubr.f32.mxu0 0.0
    %821 = vmatmul.mubr.f32.gmra.mxu0 %v751
    %v822 = vpop.f32.mrf.mxu0
    %v823 = vadd.f32 %v748, %v822
    %v824 = vpop.f32.mrf.mxu0
    %825 = vdwg.mxu0
    %v826 = vtanh.pop %v823
    %s827 = scalar_lea.vmem %s7, 48
    %v828 = vld [vmem:[%s827] sm:$0xff]
    %v829 = vld [vmem:[%s827 + $0x8] sm:$0xff]
    %v830 = vld [vmem:[%s827 + $0x10] sm:$0xf]
    %s831 = scalar_lea.vmem %s8, 2
    %v832 = vld [vmem:[%s831] sm:$0x1]
    %v834 = vlaneseq
    %v835 = vshrl.u32 %v834, 7
    %v836 = vsub.s32 0, %v835
    %v837 = vrot.slane %v832, %v836
    %v840 = vsel %vm240, %v826, 0
    %v843 = vsel %vm244, %v830, 0
    %845 = vmatprep.subr.mxu0 0.0
    %846 = vmatpush1.msra.mxu0 0.0
    %847 = vmatprep.subr.mxu0 0.0
    %848 = vmatpush1.msra.mxu0 0.0
    %849 = vmatprep.subr.mxu0 0.0
    %850 = vmatpush1.msra.mxu0 0.0
    %851 = vmatprep.subr.mxu0 0.0
    %852 = vmatpush1.msra.mxu0 0.0
    %853 = vmatprep.subr.mxu0 0.0
    %854 = vmatpush1.msra.mxu0 0.0
    %855 = vmatprep.subr.mxu0 0.0
    %856 = vmatpush1.msra.mxu0 0.0
    %857 = vmatprep.subr.mxu0 0.0
    %858 = vmatpush1.msra.mxu0 0.0
    %859 = vmatprep.subr.mxu0 0.0
    %860 = vmatpush1.msra.mxu0 0.0
    %861 = vmatprep.subr.mxu0 0.0
    %862 = vmatpush1.msra.mxu0 0.0
    %863 = vmatprep.subr.mxu0 0.0
    %864 = vmatpush1.msra.mxu0 0.0
    %865 = vmatprep.subr.mxu0 0.0
    %866 = vmatpush1.msra.mxu0 0.0
    %867 = vmatprep.subr.mxu0 0.0
    %868 = vmatpush1.msra.mxu0 0.0
    %869 = vmatprep.subr.mxu0 0.0
    %870 = vmatpush1.msra.mxu0 0.0
    %871 = vmatprep.subr.mxu0 0.0
    %872 = vmatpush1.msra.mxu0 %v843
    %873 = vmatprep.subr.mxu0 0.0
    %874 = vmatpush1.msra.mxu0 %v829
    %875 = vmatprep.subr.mxu0 0.0
    %876 = vmatpush1.msra.mxu0 %v828
    %877 = vmatprep.subr.mxu0 0.0
    %878 = vmatpush2.msra.mxu0 0.0
    %879 = vmatprep.subr.mxu0 0.0
    %880 = vmatpush2.msra.mxu0 0.0
    %881 = vmatprep.subr.mxu0 0.0
    %882 = vmatpush2.msra.mxu0 0.0
    %883 = vmatprep.subr.mxu0 0.0
    %884 = vmatpush2.msra.mxu0 0.0
    %885 = vmatprep.subr.mxu0 0.0
    %886 = vmatpush2.msra.mxu0 0.0
    %887 = vmatprep.subr.mxu0 0.0
    %888 = vmatpush2.msra.mxu0 0.0
    %889 = vmatprep.subr.mxu0 0.0
    %890 = vmatpush2.msra.mxu0 0.0
    %891 = vmatprep.subr.mxu0 0.0
    %892 = vmatpush2.msra.mxu0 0.0
    %893 = vmatprep.subr.mxu0 0.0
    %894 = vmatpush2.msra.mxu0 0.0
    %895 = vmatprep.subr.mxu0 0.0
    %896 = vmatpush2.msra.mxu0 0.0
    %897 = vmatprep.subr.mxu0 0.0
    %898 = vmatpush2.msra.mxu0 0.0
    %899 = vmatprep.subr.mxu0 0.0
    %900 = vmatpush2.msra.mxu0 0.0
    %901 = vmatprep.subr.mxu0 0.0
    %902 = vmatpush2.msra.mxu0 0.0
    %903 = vmatprep.subr.mxu0 0.0
    %904 = vmatpush2.msra.mxu0 0.0
    %905 = vmatprep.subr.mxu0 0.0
    %906 = vmatpush2.msra.mxu0 0.0
    %907 = vmatprep.subr.mxu0 0.0
    %908 = vmatpush2.msra.mxu0 0.0
    %909 = vmatprep.mubr.f32.mxu0 0.0
    %910 = vmatmul.mubr.f32.gmra.mxu0 %v840
    %v911 = vpop.f32.mrf.mxu0
    %v912 = vadd.f32 %v837, %v911
    %v913 = vpop.f32.mrf.mxu0
    %914 = vdwg.mxu0
    %v915 = vmul.f32 %v912, 1.442695
    %v916 = vpow.pop %v915
    %v917 = vmul.f32 %v916, %v328
    %919 = vrot.lane.b32.xlu0 %v912, 127
    %v920 = vpop.permute.xlu0 %919
    %v922 = vadd.f32 %v917, %v920
    %v923 = vadd.f32 %v626, %v912
    %s924 = scalar_lea.vmem %s1, 3
    %v925 = vld [vmem:[%s924] sm:$0x1]
    %927 = vset.pattern.permute.xlu0 0
    %928 = vperm.xlu0 %927, %v922
    %v929 = vpop.permute.xlu0 %928
    %v932 = vlaneseq
    %v933 = vshrl.u32 %v932, 7
    %v934 = vsub.s32 0, %v933
    %v935 = vrot.slane %v925, %v934
    %v937 = vmul.f32 %v929, %v935
    %s938 = scalar_lea.vmem %s2, 3
    %v939 = vld [vmem:[%s938] sm:$0x1]
    %v941 = vlaneseq
    %v942 = vshrl.u32 %v941, 7
    %v943 = vsub.s32 0, %v942
    %v944 = vrot.slane %v939, %v943
    %v946 = vadd.f32 %v937, %v944
    %v947 = vmax.f32 %v946, 0.0
    %s948 = scalar_lea.vmem %s3, 48
    %v949 = vld [vmem:[%s948] sm:$0xff]
    %v950 = vld [vmem:[%s948 + $0x8] sm:$0x3]
    %s951 = scalar_lea.vmem %s4, 3
    %v952 = vld [vmem:[%s951] sm:$0x1]
    %v954 = vlaneseq
    %v955 = vshrl.u32 %v954, 7
    %v956 = vsub.s32 0, %v955
    %v957 = vrot.slane %v952, %v956
    %v960 = vsel %vm65, %v947, 0
    %v963 = vsel %vm69, %v950, 0
    %965 = vmatprep.subr.mxu0 0.0
    %966 = vmatpush1.msra.mxu0 0.0
    %967 = vmatprep.subr.mxu0 0.0
    %968 = vmatpush1.msra.mxu0 0.0
    %969 = vmatprep.subr.mxu0 0.0
    %970 = vmatpush1.msra.mxu0 0.0
    %971 = vmatprep.subr.mxu0 0.0
    %972 = vmatpush1.msra.mxu0 0.0
    %973 = vmatprep.subr.mxu0 0.0
    %974 = vmatpush1.msra.mxu0 0.0
    %975 = vmatprep.subr.mxu0 0.0
    %976 = vmatpush1.msra.mxu0 0.0
    %977 = vmatprep.subr.mxu0 0.0
    %978 = vmatpush1.msra.mxu0 0.0
    %979 = vmatprep.subr.mxu0 0.0
    %980 = vmatpush1.msra.mxu0 0.0
    %981 = vmatprep.subr.mxu0 0.0
    %982 = vmatpush1.msra.mxu0 0.0
    %983 = vmatprep.subr.mxu0 0.0
    %984 = vmatpush1.msra.mxu0 0.0
    %985 = vmatprep.subr.mxu0 0.0
    %986 = vmatpush1.msra.mxu0 0.0
    %987 = vmatprep.subr.mxu0 0.0
    %988 = vmatpush1.msra.mxu0 0.0
    %989 = vmatprep.subr.mxu0 0.0
    %990 = vmatpush1.msra.mxu0 0.0
    %991 = vmatprep.subr.mxu0 0.0
    %992 = vmatpush1.msra.mxu0 0.0
    %993 = vmatprep.subr.mxu0 0.0
    %994 = vmatpush1.msra.mxu0 %v963
    %995 = vmatprep.subr.mxu0 0.0
    %996 = vmatpush1.msra.mxu0 %v949
    %997 = vmatprep.subr.mxu0 0.0
    %998 = vmatpush2.msra.mxu0 0.0
    %999 = vmatprep.subr.mxu0 0.0
    %1000 = vmatpush2.msra.mxu0 0.0
    %1001 = vmatprep.subr.mxu0 0.0
    %1002 = vmatpush2.msra.mxu0 0.0
    %1003 = vmatprep.subr.mxu0 0.0
    %1004 = vmatpush2.msra.mxu0 0.0
    %1005 = vmatprep.subr.mxu0 0.0
    %1006 = vmatpush2.msra.mxu0 0.0
    %1007 = vmatprep.subr.mxu0 0.0
    %1008 = vmatpush2.msra.mxu0 0.0
    %1009 = vmatprep.subr.mxu0 0.0
    %1010 = vmatpush2.msra.mxu0 0.0
    %1011 = vmatprep.subr.mxu0 0.0
    %1012 = vmatpush2.msra.mxu0 0.0
    %1013 = vmatprep.subr.mxu0 0.0
    %1014 = vmatpush2.msra.mxu0 0.0
    %1015 = vmatprep.subr.mxu0 0.0
    %1016 = vmatpush2.msra.mxu0 0.0
    %1017 = vmatprep.subr.mxu0 0.0
    %1018 = vmatpush2.msra.mxu0 0.0
    %1019 = vmatprep.subr.mxu0 0.0
    %1020 = vmatpush2.msra.mxu0 0.0
    %1021 = vmatprep.subr.mxu0 0.0
    %1022 = vmatpush2.msra.mxu0 0.0
    %1023 = vmatprep.subr.mxu0 0.0
    %1024 = vmatpush2.msra.mxu0 0.0
    %1025 = vmatprep.subr.mxu0 0.0
    %1026 = vmatpush2.msra.mxu0 0.0
    %1027 = vmatprep.subr.mxu0 0.0
    %1028 = vmatpush2.msra.mxu0 0.0
    %1029 = vmatprep.mubr.f32.mxu0 0.0
    %1030 = vmatmul.mubr.f32.gmra.mxu0 %v960
    %v1031 = vpop.f32.mrf.mxu0
    %v1032 = vadd.f32 %v957, %v1031
    %v1033 = vpop.f32.mrf.mxu0
    %1034 = vdwg.mxu0
    %v1035 = vmax.f32 %v1032, 0.0
    %s1036 = scalar_lea.vmem %s5, 48
    %v1037 = vld [vmem:[%s1036] sm:$0xff]
    %v1038 = vld [vmem:[%s1036 + $0x8] sm:$0x3]
    %s1039 = scalar_lea.vmem %s6, 3
    %v1040 = vld [vmem:[%s1039] sm:$0x1]
    %v1042 = vlaneseq
    %v1043 = vshrl.u32 %v1042, 7
    %v1044 = vsub.s32 0, %v1043
    %v1045 = vrot.slane %v1040, %v1044
    %v1048 = vsel %vm65, %v1035, 0
    %v1051 = vsel %vm69, %v1038, 0
    %1053 = vmatprep.subr.mxu0 0.0
    %1054 = vmatpush1.msra.mxu0 0.0
    %1055 = vmatprep.subr.mxu0 0.0
    %1056 = vmatpush1.msra.mxu0 0.0
    %1057 = vmatprep.subr.mxu0 0.0
    %1058 = vmatpush1.msra.mxu0 0.0
    %1059 = vmatprep.subr.mxu0 0.0
    %1060 = vmatpush1.msra.mxu0 0.0
    %1061 = vmatprep.subr.mxu0 0.0
    %1062 = vmatpush1.msra.mxu0 0.0
    %1063 = vmatprep.subr.mxu0 0.0
    %1064 = vmatpush1.msra.mxu0 0.0
    %1065 = vmatprep.subr.mxu0 0.0
    %1066 = vmatpush1.msra.mxu0 0.0
    %1067 = vmatprep.subr.mxu0 0.0
    %1068 = vmatpush1.msra.mxu0 0.0
    %1069 = vmatprep.subr.mxu0 0.0
    %1070 = vmatpush1.msra.mxu0 0.0
    %1071 = vmatprep.subr.mxu0 0.0
    %1072 = vmatpush1.msra.mxu0 0.0
    %1073 = vmatprep.subr.mxu0 0.0
    %1074 = vmatpush1.msra.mxu0 0.0
    %1075 = vmatprep.subr.mxu0 0.0
    %1076 = vmatpush1.msra.mxu0 0.0
    %1077 = vmatprep.subr.mxu0 0.0
    %1078 = vmatpush1.msra.mxu0 0.0
    %1079 = vmatprep.subr.mxu0 0.0
    %1080 = vmatpush1.msra.mxu0 0.0
    %1081 = vmatprep.subr.mxu0 0.0
    %1082 = vmatpush1.msra.mxu0 %v1051
    %1083 = vmatprep.subr.mxu0 0.0
    %1084 = vmatpush1.msra.mxu0 %v1037
    %1085 = vmatprep.subr.mxu0 0.0
    %1086 = vmatpush2.msra.mxu0 0.0
    %1087 = vmatprep.subr.mxu0 0.0
    %1088 = vmatpush2.msra.mxu0 0.0
    %1089 = vmatprep.subr.mxu0 0.0
    %1090 = vmatpush2.msra.mxu0 0.0
    %1091 = vmatprep.subr.mxu0 0.0
    %1092 = vmatpush2.msra.mxu0 0.0
    %1093 = vmatprep.subr.mxu0 0.0
    %1094 = vmatpush2.msra.mxu0 0.0
    %1095 = vmatprep.subr.mxu0 0.0
    %1096 = vmatpush2.msra.mxu0 0.0
    %1097 = vmatprep.subr.mxu0 0.0
    %1098 = vmatpush2.msra.mxu0 0.0
    %1099 = vmatprep.subr.mxu0 0.0
    %1100 = vmatpush2.msra.mxu0 0.0
    %1101 = vmatprep.subr.mxu0 0.0
    %1102 = vmatpush2.msra.mxu0 0.0
    %1103 = vmatprep.subr.mxu0 0.0
    %1104 = vmatpush2.msra.mxu0 0.0
    %1105 = vmatprep.subr.mxu0 0.0
    %1106 = vmatpush2.msra.mxu0 0.0
    %1107 = vmatprep.subr.mxu0 0.0
    %1108 = vmatpush2.msra.mxu0 0.0
    %1109 = vmatprep.subr.mxu0 0.0
    %1110 = vmatpush2.msra.mxu0 0.0
    %1111 = vmatprep.subr.mxu0 0.0
    %1112 = vmatpush2.msra.mxu0 0.0
    %1113 = vmatprep.subr.mxu0 0.0
    %1114 = vmatpush2.msra.mxu0 0.0
    %1115 = vmatprep.subr.mxu0 0.0
    %1116 = vmatpush2.msra.mxu0 0.0
    %1117 = vmatprep.mubr.f32.mxu0 0.0
    %1118 = vmatmul.mubr.f32.gmra.mxu0 %v1048
    %v1119 = vpop.f32.mrf.mxu0
    %v1120 = vadd.f32 %v1045, %v1119
    %v1121 = vpop.f32.mrf.mxu0
    %1122 = vdwg.mxu0
    %v1123 = vtanh.pop %v1120
    %s1124 = scalar_lea.vmem %s7, 72
    %v1125 = vld [vmem:[%s1124] sm:$0xff]
    %v1126 = vld [vmem:[%s1124 + $0x8] sm:$0xff]
    %v1127 = vld [vmem:[%s1124 + $0x10] sm:$0xf]
    %s1128 = scalar_lea.vmem %s8, 3
    %v1129 = vld [vmem:[%s1128] sm:$0x1]
    %v1131 = vlaneseq
    %v1132 = vshrl.u32 %v1131, 7
    %v1133 = vsub.s32 0, %v1132
    %v1134 = vrot.slane %v1129, %v1133
    %v1137 = vsel %vm240, %v1123, 0
    %v1140 = vsel %vm244, %v1127, 0
    %1142 = vmatprep.subr.mxu0 0.0
    %1143 = vmatpush1.msra.mxu0 0.0
    %1144 = vmatprep.subr.mxu0 0.0
    %1145 = vmatpush1.msra.mxu0 0.0
    %1146 = vmatprep.subr.mxu0 0.0
    %1147 = vmatpush1.msra.mxu0 0.0
    %1148 = vmatprep.subr.mxu0 0.0
    %1149 = vmatpush1.msra.mxu0 0.0
    %1150 = vmatprep.subr.mxu0 0.0
    %1151 = vmatpush1.msra.mxu0 0.0
    %1152 = vmatprep.subr.mxu0 0.0
    %1153 = vmatpush1.msra.mxu0 0.0
    %1154 = vmatprep.subr.mxu0 0.0
    %1155 = vmatpush1.msra.mxu0 0.0
    %1156 = vmatprep.subr.mxu0 0.0
    %1157 = vmatpush1.msra.mxu0 0.0
    %1158 = vmatprep.subr.mxu0 0.0
    %1159 = vmatpush1.msra.mxu0 0.0
    %1160 = vmatprep.subr.mxu0 0.0
    %1161 = vmatpush1.msra.mxu0 0.0
    %1162 = vmatprep.subr.mxu0 0.0
    %1163 = vmatpush1.msra.mxu0 0.0
    %1164 = vmatprep.subr.mxu0 0.0
    %1165 = vmatpush1.msra.mxu0 0.0
    %1166 = vmatprep.subr.mxu0 0.0
    %1167 = vmatpush1.msra.mxu0 0.0
    %1168 = vmatprep.subr.mxu0 0.0
    %1169 = vmatpush1.msra.mxu0 %v1140
    %1170 = vmatprep.subr.mxu0 0.0
    %1171 = vmatpush1.msra.mxu0 %v1126
    %1172 = vmatprep.subr.mxu0 0.0
    %1173 = vmatpush1.msra.mxu0 %v1125
    %1174 = vmatprep.subr.mxu0 0.0
    %1175 = vmatpush2.msra.mxu0 0.0
    %1176 = vmatprep.subr.mxu0 0.0
    %1177 = vmatpush2.msra.mxu0 0.0
    %1178 = vmatprep.subr.mxu0 0.0
    %1179 = vmatpush2.msra.mxu0 0.0
    %1180 = vmatprep.subr.mxu0 0.0
    %1181 = vmatpush2.msra.mxu0 0.0
    %1182 = vmatprep.subr.mxu0 0.0
    %1183 = vmatpush2.msra.mxu0 0.0
    %1184 = vmatprep.subr.mxu0 0.0
    %1185 = vmatpush2.msra.mxu0 0.0
    %1186 = vmatprep.subr.mxu0 0.0
    %1187 = vmatpush2.msra.mxu0 0.0
    %1188 = vmatprep.subr.mxu0 0.0
    %1189 = vmatpush2.msra.mxu0 0.0
    %1190 = vmatprep.subr.mxu0 0.0
    %1191 = vmatpush2.msra.mxu0 0.0
    %1192 = vmatprep.subr.mxu0 0.0
    %1193 = vmatpush2.msra.mxu0 0.0
    %1194 = vmatprep.subr.mxu0 0.0
    %1195 = vmatpush2.msra.mxu0 0.0
    %1196 = vmatprep.subr.mxu0 0.0
    %1197 = vmatpush2.msra.mxu0 0.0
    %1198 = vmatprep.subr.mxu0 0.0
    %1199 = vmatpush2.msra.mxu0 0.0
    %1200 = vmatprep.subr.mxu0 0.0
    %1201 = vmatpush2.msra.mxu0 0.0
    %1202 = vmatprep.subr.mxu0 0.0
    %1203 = vmatpush2.msra.mxu0 0.0
    %1204 = vmatprep.subr.mxu0 0.0
    %1205 = vmatpush2.msra.mxu0 0.0
    %1206 = vmatprep.mubr.f32.mxu0 0.0
    %1207 = vmatmul.mubr.f32.gmra.mxu0 %v1137
    %v1208 = vpop.f32.mrf.mxu0
    %v1209 = vadd.f32 %v1134, %v1208
    %v1210 = vpop.f32.mrf.mxu0
    %1211 = vdwg.mxu0
    %v1212 = vmul.f32 %v1209, 1.442695
    %v1213 = vpow.pop %v1212
    %v1214 = vmul.f32 %v1213, %v625
    %1216 = vrot.lane.b32.xlu0 %v1209, 127
    %v1217 = vpop.permute.xlu0 %1216
    %v1219 = vadd.f32 %v1214, %v1217
    %v1220 = vadd.f32 %v923, %v1209
    %v1221 = vmul.f32 %v922, %v922
    %v1222 = vmul.f32 %v1219, %v1219
    %v1223 = vadd.f32 %v1221, %v1222
    %v1224 = vmul.f32 %v1223, 0.5
    %v1225 = vsub.f32 -1.837877, %v1224
    %v1226 = vadd.f32 %v1225, %v1220
    %1227 = vrot.lane.b32.xlu0 %v922, 1
    %v1228 = vpop.permute.xlu0 %1227
    %1231 = vrot.lane.b32.xlu0 %v1219, 2
    %v1232 = vpop.permute.xlu0 %1231
    %vm1234 = vcmask 7168
    %v1235 = vsel %vm1234, %v1226, %v1228
    %vm1236 = vcmask 15360
    %v1237 = vsel %vm1236, %v1235, %v1232
    %vm1238 = vcmask 23552
    %v1239 = vsel %vm1238, %v1237, 0.0
    %vm1240 = vcmask 64512
    %1241 = vst.msk [vmem:[#allocation2] sm:$0xff] %vm1240, %v1239
    // Predicated region
    $region38: #{tpu_custom_call.1} parent=1 // pred_check
      _
    $region39: #{tpu_custom_call.1} parent=1 // pred_check_branch
      %1243 = sbr.rel (0) target = $region41
    $region40: #{tpu_custom_call.1} parent=1 // pred_region
      %s1245 = ssub.s32 128, 128
      %1246 = vsyncadd [#allocation3], %s1245
      %s1248 = sshll.u32 [#allocation2], 4
      %s1249 = int_to_ptr.vmem [resolvable:$true] %s1248
      %1251 = dma.vmem_to_hbm [thread:$0]  %s1249, 128, %s9, [#allocation3]
    $region41: #{tpu_custom_call.1} parent=1 // pred_fallthru
      _
    // Predicated region
    $region42: #{tpu_custom_call.1} parent=1 // pred_check
      _
    $region43: #{tpu_custom_call.1} parent=1 // pred_check_branch
      %1253 = sbr.rel (0) target = $region45
    $region44: #{tpu_custom_call.1} parent=1 // pred_region
      %1254 = dma.done [#allocation3], 128
    $region45: #{tpu_custom_call.1} parent=1 // pred_fallthru
      _
    %1255 = vsyncpa [#allocation3], 1

</llo_original>
